<compile_context>
chip_gen: v5e
topology: v5e:2x2
jax: 0.10.0
libtpu: 0.0.40
codegen_flags: <defaults>
</compile_context>

<pallas_src>
import functools

import jax
import jax.numpy as jnp
from jax import lax
from jax.experimental import pallas as pl
from jax.experimental.pallas import tpu as pltpu


def _hardswish(x):
    # x * relu6(x + 3) / 6
    return x * jnp.clip(x + 3.0, 0.0, 6.0) * (1.0 / 6.0)


def _round_up(x, m):
    return (x + m - 1) // m * m


def _vmem_limit_bytes():
    """Generation-aware VMEM limit: ~3/4 of physical (96 MiB on 128-MiB v5e/v6e,
    48 MiB on 64-MiB v7x).  Safe fallback if the query is unavailable."""
    try:
        info = pltpu.get_tpu_info()
        phys = getattr(info, "vmem_capacity_bytes", None)
        if phys:
            return int(min(phys * 3 // 4, phys - (8 << 20)))
    except Exception:
        pass
    return 48 * 1024 * 1024


def _pick_tile_h(Ho, Wo, Wq, Cp, Fp, stride, halo, in_bytes, out_bytes,
                 vmem_budget, n_batch):
    """Pick the output-row strip height TH: largest that fits the VMEM budget
    (double-buffered in/out), bounded per-step work, TH*Wo a multiple of 8 when
    cheap, and >= 2 grid steps so both v7x TensorCores get work at batch=1."""
    def footprint(th):
        x_strip = stride * stride * (th + halo) * Wq * Cp * in_bytes
        o_tile = th * Wo * Fp * out_bytes
        interm = th * Wo * (Cp + Fp) * 4          # f32 dw + pw intermediates
        return 2 * x_strip + 2 * o_tile + interm

    th = 1
    for cand in range(1, Ho + 1):
        if footprint(cand) <= vmem_budget:
            th = cand
        else:
            break
    # keep per-step work bounded (~4K output pixels -> MXU M dim)
    th = min(th, max(8, 4096 // max(Wo, 1)), Ho)
    # prefer a sublane-friendly strip (TH*Wo % 8 == 0) when it costs < 2x steps
    for cand in range(th, 0, -1):
        if (cand * Wo) % 8 == 0:
            if cand * 2 >= th:
                th = cand
            break
    # v7x has 2 TensorCores: make sure there are >= 2 parallel grid steps
    if n_batch * pl.cdiv(Ho, th) < 2 and Ho >= 2:
        th = pl.cdiv(Ho, 2)
    return max(int(th), 1)


def _dws_kernel(x_ref, wdw_ref, dwb_ref, wpw_ref, pwb_ref, o_ref, *,
                K, stride, TH, halo, Wo):
    """One (batch, output-row-strip) tile per grid step.

    x_ref   : (1, 1, s*s*(TH+halo), Wq, Cp)  polyphase row strip (phase-major)
    wdw_ref : (K, K, Cp)   depthwise weights, BN scale pre-folded
    dwb_ref : (1, Cp)      folded dw BN bias
    wpw_ref : (Cp, Fp)     pointwise weights, BN scale and dw-hardswish 1/6 folded
    pwb_ref : (1, Fp)      folded pw BN bias
    o_ref   : (1, TH, Wo, Fp)
    """
    Cp = x_ref.shape[-1]
    ph_rows = TH + halo

    # ---- depthwise KxK conv on the VPU -------------------------------------
    # One lane-dense VMEM read per (tap-row, column-phase); the K column taps
    # are derived with static in-register slices (sublane shifts on the XLU)
    # instead of issuing K separate Ref reads (relieves the 3 vld slots).
    acc = None
    for dy in range(K):
        qy, ry = divmod(dy, stride)
        for rx in range(stride):
            dxs = [dx for dx in range(K) if dx % stride == rx]
            if not dxs:
                continue
            phase = ry * stride + rx
            row = x_ref[0, 0, pl.ds(phase * ph_rows + qy, TH), :, :]
            row = row.astype(jnp.float32)        # f32 accumulation (v5e-safe)
            for dx in dxs:
                qx = dx // stride
                tap = row[:, qx:qx + Wo, :] * wdw_ref[dy, dx, :]
                acc = tap if acc is None else acc + tap   # first tap initialises

    # folded-BN bias + hardswish; its 1/6 factor is folded into wpw (the
    # pointwise conv is linear), so no extra full-tile multiply here.
    y = acc + dwb_ref[0, :]
    dw = y * jnp.clip(y + 3.0, 0.0, 6.0)

    # ---- pointwise 1x1 conv == (TH*Wo, Cp) @ (Cp, Fp) on the MXU ------------
    rhs = wpw_ref[...]
    dw2d = dw.reshape(TH * Wo, Cp).astype(rhs.dtype)
    pw = jnp.dot(dw2d, rhs, preferred_element_type=jnp.float32)
    pw = pw + pwb_ref[0, :]
    pw = pw * jnp.clip(pw + 3.0, 0.0, 6.0) * (1.0 / 6.0)

    # Fp is a multiple of 128 -> lane-dense, unmasked stores (bf16 in the fast
    # path halves vst pressure and HBM writeback).
    o_ref[0] = pw.reshape(TH, Wo, pw.shape[-1]).astype(o_ref.dtype)


@functools.partial(jax.jit,
                   static_argnames=("stride", "dw_size", "act_bf16", "mxu_bf16"))
def depthwise_separable_forward(x_nchw, params, *, stride=1, dw_size=3,
                                act_bf16=True, mxu_bf16=True, eps=1e-5):
    """x_nchw: (N, C, H, W) float32.  Returns (N, F, Ho, Wo).  Eval-mode BN.

    act_bf16 / mxu_bf16 default True (fast path); set both False for strict
    f32 parity with the PyTorch module.
    """
    N, C, H, W = x_nchw.shape
    K, s = dw_size, stride
    pad = (K - 1) // 2
    Ho = (H + 2 * pad - K) // s + 1
    Wo = (W + 2 * pad - K) // s + 1
    halo = (K - 1) // s                        # extra phase-rows needed per strip

    F_out = params["pw_w"].shape[0]
    # Lane-dense channel padding (128-lane axis).
    Cp = _round_up(C, 128)
    Fp = _round_up(F_out, 128)

    act_dtype = jnp.bfloat16 if act_bf16 else jnp.float32
    mxu_dtype = jnp.bfloat16 if mxu_bf16 else jnp.float32
    out_store_dtype = jnp.bfloat16 if act_bf16 else x_nchw.dtype

    # --- fold BN (eval semantics) into the conv weights ----------------------
    dw_scale = params["dw_bn_g"] * lax.rsqrt(params["dw_bn_v"] + eps)   # (C,)
    dw_bias = params["dw_bn_b"] - params["dw_bn_m"] * dw_scale
    pw_scale = params["pw_bn_g"] * lax.rsqrt(params["pw_bn_v"] + eps)   # (F,)
    pw_bias = params["pw_bn_b"] - params["pw_bn_m"] * pw_scale

    # depthwise weight: torch (C,1,K,K) -> (K,K,C), fold per-channel BN scale
    w_dw = jnp.transpose(params["dw_w"][:, 0], (1, 2, 0)) * dw_scale
    # pointwise weight: torch (F,C,1,1) -> (C,F); fold pw BN scale AND the
    # depthwise hardswish's 1/6 factor (the 1x1 conv is linear).
    w_pw = jnp.transpose(params["pw_w"][:, :, 0, 0], (1, 0)) * (pw_scale * (1.0 / 6.0))

    w_dw = jnp.pad(w_dw, ((0, 0), (0, 0), (0, Cp - C))).astype(jnp.float32)
    dw_bias = jnp.pad(dw_bias, (0, Cp - C)).reshape(1, Cp).astype(jnp.float32)
    w_pw = jnp.pad(w_pw, ((0, Cp - C), (0, Fp - F_out))).astype(mxu_dtype)
    pw_bias = jnp.pad(pw_bias, (0, Fp - F_out)).reshape(1, Fp).astype(jnp.float32)

    # --- input: NCHW -> NHWC (bf16), pad, channel-pad, polyphase -------------
    Hq = -(-(H + 2 * pad) // s)
    Wq = -(-(W + 2 * pad) // s)
    x = jnp.transpose(x_nchw, (0, 2, 3, 1)).astype(act_dtype)
    x = jnp.pad(x, ((0, 0),
                    (pad, Hq * s - H - pad),
                    (pad, Wq * s - W - pad),
                    (0, Cp - C)))
    # phase (ry, rx) holds x_padded[ry::s, rx::s, :]  -> all taps contiguous
    x = x.reshape(N, Hq, s, Wq, s, Cp).transpose(0, 2, 4, 1, 3, 5)
    x = x.reshape(N, s * s, Hq, Wq, Cp)

    # --- strip tiling of output rows (VMEM-bounded, pipelined per strip) -----
    vmem_limit = _vmem_limit_bytes()
    in_bytes = jnp.dtype(act_dtype).itemsize
    out_bytes = jnp.dtype(out_store_dtype).itemsize
    TH = _pick_tile_h(Ho, Wo, Wq, Cp, Fp, s, halo, in_bytes, out_bytes,
                      vmem_budget=vmem_limit // 2, n_batch=N)
    S = pl.cdiv(Ho, TH)
    PH = TH + halo

    # pad phase-rows so every strip (incl. a short last strip) has PH rows
    rows_needed = S * TH + halo
    if rows_needed > Hq:
        x = jnp.pad(x, ((0, 0), (0, 0), (0, rows_needed - Hq), (0, 0), (0, 0)))
    # pre-split into non-overlapping strip blocks (halo rows duplicated); this
    # keeps BlockSpec blocks disjoint so Pallas can double-buffer strips.
    strips = [lax.slice_in_dim(x, t * TH, t * TH + PH, axis=2) for t in range(S)]
    xs = jnp.stack(strips, axis=1)                  # (N, S, s*s, PH, Wq, Cp)
    xs = xs.reshape(N, S, s * s * PH, Wq, Cp)       # phase-major row axis

    kernel = functools.partial(_dws_kernel, K=K, stride=s, TH=TH, halo=halo, Wo=Wo)

    flops = 2 * N * Ho * Wo * Cp * (Fp + K * K)
    bytes_accessed = (xs.size * in_bytes
                      + N * S * TH * Wo * Fp * out_bytes
                      + w_dw.size * 4
                      + w_pw.size * jnp.dtype(mxu_dtype).itemsize
                      + (Cp + Fp) * 4)

    out = pl.pallas_call(
        kernel,
        out_shape=jax.ShapeDtypeStruct((N, S * TH, Wo, Fp), out_store_dtype),
        grid_spec=pltpu.PrefetchScalarGridSpec(
            num_scalar_prefetch=0,
            grid=(N, S),
            in_specs=[
                # one polyphase row strip (with halo) per grid step
                pl.BlockSpec((1, 1, s * s * PH, Wq, Cp),
                             lambda n, t: (n, t, 0, 0, 0)),
                pl.BlockSpec((K, K, Cp), lambda n, t: (0, 0, 0)),
                pl.BlockSpec((1, Cp), lambda n, t: (0, 0)),
                pl.BlockSpec((Cp, Fp), lambda n, t: (0, 0)),
                pl.BlockSpec((1, Fp), lambda n, t: (0, 0)),
            ],
            out_specs=pl.BlockSpec((1, TH, Wo, Fp),
                                   lambda n, t: (n, t, 0, 0)),
        ),
        compiler_params=pltpu.CompilerParams(
            dimension_semantics=("parallel", "parallel"),
            vmem_limit_bytes=vmem_limit),
        cost_estimate=pl.CostEstimate(flops=int(flops), transcendentals=0,
                                      bytes_accessed=int(bytes_accessed)),
    )(xs, w_dw, dw_bias, w_pw, pw_bias)

    # drop row/channel padding, back to NCHW f32 (fused by XLA with epilogue)
    out = out[:, :Ho, :, :F_out].astype(x_nchw.dtype)
    return jnp.transpose(out, (0, 3, 1, 2))


def _reference_forward(x_nchw, params, *, stride=1, dw_size=3):
    """Pure-JAX reference (NCHW, mirrors the PyTorch module) for validation."""
    C = x_nchw.shape[1]
    pad = (dw_size - 1) // 2
    eps = 1e-5

    def bn(x, g, b, m, v):
        return (x - m[None, :, None, None]) / jnp.sqrt(v + eps)[None, :, None, None] \
            * g[None, :, None, None] + b[None, :, None, None]

    y = lax.conv_general_dilated(
        x_nchw, params["dw_w"], window_strides=(stride, stride),
        padding=((pad, pad), (pad, pad)), feature_group_count=C,
        dimension_numbers=("NCHW", "OIHW", "NCHW"))
    y = _hardswish(bn(y, params["dw_bn_g"], params["dw_bn_b"],
                      params["dw_bn_m"], params["dw_bn_v"]))
    y = lax.conv_general_dilated(
        y, params["pw_w"], window_strides=(1, 1), padding="VALID",
        dimension_numbers=("NCHW", "OIHW", "NCHW"))
    y = _hardswish(bn(y, params["pw_bn_g"], params["pw_bn_b"],
                      params["pw_bn_m"], params["pw_bn_v"]))
    return y


if __name__ == "__main__":
    # DepthwiseSeparable(num_channels=4, num_filters=8, dw_size=3)
    N, C, H, W = 2, 4, 16, 16
    F_out, K = 8, 3

    key = jax.random.PRNGKey(0)
    ks = jax.random.split(key, 11)
    params = {
        # torch-shaped weights, deterministically initialized
        "dw_w": jax.random.normal(ks[0], (C, 1, K, K), jnp.float32) * 0.1,
        "pw_w": jax.random.normal(ks[1], (F_out, C, 1, 1), jnp.float32) * 0.1,
        "dw_bn_g": 1.0 + 0.1 * jax.random.normal(ks[2], (C,), jnp.float32),
        "dw_bn_b": 0.1 * jax.random.normal(ks[3], (C,), jnp.float32),
        "dw_bn_m": 0.05 * jax.random.normal(ks[4], (C,), jnp.float32),
        "dw_bn_v": 1.0 + 0.1 * jax.random.uniform(ks[5], (C,), jnp.float32),
        "pw_bn_g": 1.0 + 0.1 * jax.random.normal(ks[6], (F_out,), jnp.float32),
        "pw_bn_b": 0.1 * jax.random.normal(ks[7], (F_out,), jnp.float32),
        "pw_bn_m": 0.05 * jax.random.normal(ks[8], (F_out,), jnp.float32),
        "pw_bn_v": 1.0 + 0.1 * jax.random.uniform(ks[9], (F_out,), jnp.float32),
    }
    x = jax.random.normal(ks[10], (N, C, H, W), jnp.float32)

    # --- stride=1, strict all-f32 path --------------------------------------
    out1 = jax.block_until_ready(depthwise_separable_forward(
        x, params, stride=1, dw_size=K, act_bf16=False, mxu_bf16=False))
    ref1 = _reference_forward(x, params, stride=1, dw_size=K)
    assert out1.shape == ref1.shape == (N, F_out, H, W)
    assert jnp.allclose(out1, ref1, atol=2e-4, rtol=2e-4), \
        float(jnp.max(jnp.abs(out1 - ref1)))

    # --- stride=2, strict f32: exercises the polyphase + halo strip path ----
    out2 = jax.block_until_ready(depthwise_separable_forward(
        x, params, stride=2, dw_size=K, act_bf16=False, mxu_bf16=False))
    ref2 = _reference_forward(x, params, stride=2, dw_size=K)
    assert out2.shape == ref2.shape == (N, F_out, H // 2, W // 2)
    assert jnp.allclose(out2, ref2, atol=2e-4, rtol=2e-4), \
        float(jnp.max(jnp.abs(out2 - ref2)))

    # --- default fast path: bf16 activations + bf16 MXU (loose check) -------
    out3 = jax.block_until_ready(
        depthwise_separable_forward(x, params, stride=1, dw_size=K))
    assert out3.shape == ref1.shape
    assert jnp.allclose(out3, ref1, atol=5e-2, rtol=5e-2), \
        float(jnp.max(jnp.abs(out3 - ref1)))

    print("KERNEL_OK")
</pallas_src>

<mosaic_0001>
module attributes {stable_mosaic.version = 11 : i64} {
  func.func @_dws_kernel(%arg0: i32, %arg1: i32, %arg2: memref<1x1x18x18x128xf32, #tpu.memory_space<vmem>>, %arg3: memref<3x3x128xf32, #tpu.memory_space<vmem>>, %arg4: memref<1x128xf32, #tpu.memory_space<vmem>>, %arg5: memref<128x128xf32, #tpu.memory_space<vmem>>, %arg6: memref<1x128xf32, #tpu.memory_space<vmem>>, %arg7: memref<1x16x16x128xf32, #tpu.memory_space<vmem>>) attributes {dimension_semantics = [#tpu.dimension_semantics<parallel>, #tpu.dimension_semantics<parallel>], iteration_bounds = array<i64: 2, 1>, scalar_prefetch = 0 : i64, scratch_operands = 0 : i64, tpu.core_type = #tpu.core_type<tc>, window_params = [{transform_indices = @transform_0, window_bounds = array<i64: 1, 1, 18, 18, 128>}, {pipeline_mode = #tpu.pipeline_mode<synchronous>, transform_indices = @transform_1, window_bounds = array<i64: 3, 3, 128>}, {pipeline_mode = #tpu.pipeline_mode<synchronous>, transform_indices = @transform_2, window_bounds = array<i64: 1, 128>}, {pipeline_mode = #tpu.pipeline_mode<synchronous>, transform_indices = @transform_3, window_bounds = array<i64: 128, 128>}, {pipeline_mode = #tpu.pipeline_mode<synchronous>, transform_indices = @transform_4, window_bounds = array<i64: 1, 128>}, {transform_indices = @transform_5, window_bounds = array<i64: 1, 16, 16, 128>}]} {
    %c0 = arith.constant 0 : index
    %c0_0 = arith.constant 0 : index
    %c0_1 = arith.constant 0 : index
    %c0_2 = arith.constant 0 : index
    %c0_3 = arith.constant 0 : index
    %0 = vector.load %arg2[%c0, %c0_0, %c0_1, %c0_2, %c0_3] : memref<1x1x18x18x128xf32, #tpu.memory_space<vmem>>, vector<1x1x16x18x128xf32>
    %1 = vector.shape_cast %0 : vector<1x1x16x18x128xf32> to vector<16x18x128xf32>
    %2 = vector.extract_strided_slice %1 {offsets = [0, 0, 0], sizes = [16, 16, 128], strides = [1, 1, 1]} : vector<16x18x128xf32> to vector<16x16x128xf32>
    %c0_4 = arith.constant 0 : index
    %c0_5 = arith.constant 0 : index
    %c0_6 = arith.constant 0 : index
    %3 = vector.load %arg3[%c0_4, %c0_5, %c0_6] : memref<3x3x128xf32, #tpu.memory_space<vmem>>, vector<1x1x128xf32>
    %4 = vector.shape_cast %3 : vector<1x1x128xf32> to vector<128xf32>
    %5 = vector.shape_cast %4 : vector<128xf32> to vector<1x1x128xf32>
    %6 = vector.broadcast %5 : vector<1x1x128xf32> to vector<16x16x128xf32>
    %7 = arith.mulf %2, %6 : vector<16x16x128xf32>
    %8 = vector.extract_strided_slice %1 {offsets = [0, 1, 0], sizes = [16, 16, 128], strides = [1, 1, 1]} : vector<16x18x128xf32> to vector<16x16x128xf32>
    %c0_7 = arith.constant 0 : index
    %c1 = arith.constant 1 : index
    %c0_8 = arith.constant 0 : index
    %9 = vector.load %arg3[%c0_7, %c1, %c0_8] : memref<3x3x128xf32, #tpu.memory_space<vmem>>, vector<1x1x128xf32>
    %10 = vector.shape_cast %9 : vector<1x1x128xf32> to vector<128xf32>
    %11 = vector.shape_cast %10 : vector<128xf32> to vector<1x1x128xf32>
    %12 = vector.broadcast %11 : vector<1x1x128xf32> to vector<16x16x128xf32>
    %13 = arith.mulf %8, %12 : vector<16x16x128xf32>
    %14 = arith.addf %7, %13 : vector<16x16x128xf32>
    %15 = vector.extract_strided_slice %1 {offsets = [0, 2, 0], sizes = [16, 16, 128], strides = [1, 1, 1]} : vector<16x18x128xf32> to vector<16x16x128xf32>
    %c0_9 = arith.constant 0 : index
    %c2 = arith.constant 2 : index
    %c0_10 = arith.constant 0 : index
    %16 = vector.load %arg3[%c0_9, %c2, %c0_10] : memref<3x3x128xf32, #tpu.memory_space<vmem>>, vector<1x1x128xf32>
    %17 = vector.shape_cast %16 : vector<1x1x128xf32> to vector<128xf32>
    %18 = vector.shape_cast %17 : vector<128xf32> to vector<1x1x128xf32>
    %19 = vector.broadcast %18 : vector<1x1x128xf32> to vector<16x16x128xf32>
    %20 = arith.mulf %15, %19 : vector<16x16x128xf32>
    %21 = arith.addf %14, %20 : vector<16x16x128xf32>
    %c0_11 = arith.constant 0 : index
    %c0_12 = arith.constant 0 : index
    %c1_13 = arith.constant 1 : index
    %c0_14 = arith.constant 0 : index
    %c0_15 = arith.constant 0 : index
    %22 = vector.load %arg2[%c0_11, %c0_12, %c1_13, %c0_14, %c0_15] : memref<1x1x18x18x128xf32, #tpu.memory_space<vmem>>, vector<1x1x16x18x128xf32>
    %23 = vector.shape_cast %22 : vector<1x1x16x18x128xf32> to vector<16x18x128xf32>
    %24 = vector.extract_strided_slice %23 {offsets = [0, 0, 0], sizes = [16, 16, 128], strides = [1, 1, 1]} : vector<16x18x128xf32> to vector<16x16x128xf32>
    %c1_16 = arith.constant 1 : index
    %c0_17 = arith.constant 0 : index
    %c0_18 = arith.constant 0 : index
    %25 = vector.load %arg3[%c1_16, %c0_17, %c0_18] : memref<3x3x128xf32, #tpu.memory_space<vmem>>, vector<1x1x128xf32>
    %26 = vector.shape_cast %25 : vector<1x1x128xf32> to vector<128xf32>
    %27 = vector.shape_cast %26 : vector<128xf32> to vector<1x1x128xf32>
    %28 = vector.broadcast %27 : vector<1x1x128xf32> to vector<16x16x128xf32>
    %29 = arith.mulf %24, %28 : vector<16x16x128xf32>
    %30 = arith.addf %21, %29 : vector<16x16x128xf32>
    %31 = vector.extract_strided_slice %23 {offsets = [0, 1, 0], sizes = [16, 16, 128], strides = [1, 1, 1]} : vector<16x18x128xf32> to vector<16x16x128xf32>
    %c1_19 = arith.constant 1 : index
    %c1_20 = arith.constant 1 : index
    %c0_21 = arith.constant 0 : index
    %32 = vector.load %arg3[%c1_19, %c1_20, %c0_21] : memref<3x3x128xf32, #tpu.memory_space<vmem>>, vector<1x1x128xf32>
    %33 = vector.shape_cast %32 : vector<1x1x128xf32> to vector<128xf32>
    %34 = vector.shape_cast %33 : vector<128xf32> to vector<1x1x128xf32>
    %35 = vector.broadcast %34 : vector<1x1x128xf32> to vector<16x16x128xf32>
    %36 = arith.mulf %31, %35 : vector<16x16x128xf32>
    %37 = arith.addf %30, %36 : vector<16x16x128xf32>
    %38 = vector.extract_strided_slice %23 {offsets = [0, 2, 0], sizes = [16, 16, 128], strides = [1, 1, 1]} : vector<16x18x128xf32> to vector<16x16x128xf32>
    %c1_22 = arith.constant 1 : index
    %c2_23 = arith.constant 2 : index
    %c0_24 = arith.constant 0 : index
    %39 = vector.load %arg3[%c1_22, %c2_23, %c0_24] : memref<3x3x128xf32, #tpu.memory_space<vmem>>, vector<1x1x128xf32>
    %40 = vector.shape_cast %39 : vector<1x1x128xf32> to vector<128xf32>
    %41 = vector.shape_cast %40 : vector<128xf32> to vector<1x1x128xf32>
    %42 = vector.broadcast %41 : vector<1x1x128xf32> to vector<16x16x128xf32>
    %43 = arith.mulf %38, %42 : vector<16x16x128xf32>
    %44 = arith.addf %37, %43 : vector<16x16x128xf32>
    %c0_25 = arith.constant 0 : index
    %c0_26 = arith.constant 0 : index
    %c2_27 = arith.constant 2 : index
    %c0_28 = arith.constant 0 : index
    %c0_29 = arith.constant 0 : index
    %45 = vector.load %arg2[%c0_25, %c0_26, %c2_27, %c0_28, %c0_29] : memref<1x1x18x18x128xf32, #tpu.memory_space<vmem>>, vector<1x1x16x18x128xf32>
    %46 = vector.shape_cast %45 : vector<1x1x16x18x128xf32> to vector<16x18x128xf32>
    %47 = vector.extract_strided_slice %46 {offsets = [0, 0, 0], sizes = [16, 16, 128], strides = [1, 1, 1]} : vector<16x18x128xf32> to vector<16x16x128xf32>
    %c2_30 = arith.constant 2 : index
    %c0_31 = arith.constant 0 : index
    %c0_32 = arith.constant 0 : index
    %48 = vector.load %arg3[%c2_30, %c0_31, %c0_32] : memref<3x3x128xf32, #tpu.memory_space<vmem>>, vector<1x1x128xf32>
    %49 = vector.shape_cast %48 : vector<1x1x128xf32> to vector<128xf32>
    %50 = vector.shape_cast %49 : vector<128xf32> to vector<1x1x128xf32>
    %51 = vector.broadcast %50 : vector<1x1x128xf32> to vector<16x16x128xf32>
    %52 = arith.mulf %47, %51 : vector<16x16x128xf32>
    %53 = arith.addf %44, %52 : vector<16x16x128xf32>
    %54 = vector.extract_strided_slice %46 {offsets = [0, 1, 0], sizes = [16, 16, 128], strides = [1, 1, 1]} : vector<16x18x128xf32> to vector<16x16x128xf32>
    %c2_33 = arith.constant 2 : index
    %c1_34 = arith.constant 1 : index
    %c0_35 = arith.constant 0 : index
    %55 = vector.load %arg3[%c2_33, %c1_34, %c0_35] : memref<3x3x128xf32, #tpu.memory_space<vmem>>, vector<1x1x128xf32>
    %56 = vector.shape_cast %55 : vector<1x1x128xf32> to vector<128xf32>
    %57 = vector.shape_cast %56 : vector<128xf32> to vector<1x1x128xf32>
    %58 = vector.broadcast %57 : vector<1x1x128xf32> to vector<16x16x128xf32>
    %59 = arith.mulf %54, %58 : vector<16x16x128xf32>
    %60 = arith.addf %53, %59 : vector<16x16x128xf32>
    %61 = vector.extract_strided_slice %46 {offsets = [0, 2, 0], sizes = [16, 16, 128], strides = [1, 1, 1]} : vector<16x18x128xf32> to vector<16x16x128xf32>
    %c2_36 = arith.constant 2 : index
    %c2_37 = arith.constant 2 : index
    %c0_38 = arith.constant 0 : index
    %62 = vector.load %arg3[%c2_36, %c2_37, %c0_38] : memref<3x3x128xf32, #tpu.memory_space<vmem>>, vector<1x1x128xf32>
    %63 = vector.shape_cast %62 : vector<1x1x128xf32> to vector<128xf32>
    %64 = vector.shape_cast %63 : vector<128xf32> to vector<1x1x128xf32>
    %65 = vector.broadcast %64 : vector<1x1x128xf32> to vector<16x16x128xf32>
    %66 = arith.mulf %61, %65 : vector<16x16x128xf32>
    %67 = arith.addf %60, %66 : vector<16x16x128xf32>
    %c0_39 = arith.constant 0 : index
    %c0_40 = arith.constant 0 : index
    %68 = vector.load %arg4[%c0_39, %c0_40] : memref<1x128xf32, #tpu.memory_space<vmem>>, vector<1x128xf32>
    %69 = vector.shape_cast %68 : vector<1x128xf32> to vector<128xf32>
    %70 = vector.shape_cast %69 : vector<128xf32> to vector<1x1x128xf32>
    %71 = vector.broadcast %70 : vector<1x1x128xf32> to vector<16x16x128xf32>
    %72 = arith.addf %67, %71 : vector<16x16x128xf32>
    %cst = arith.constant 3.000000e+00 : f32
    %73 = vector.broadcast %cst : f32 to vector<16x16x128xf32>
    %74 = arith.addf %72, %73 : vector<16x16x128xf32>
    %cst_41 = arith.constant 0.000000e+00 : f32
    %cst_42 = arith.constant 6.000000e+00 : f32
    %75 = vector.broadcast %cst_41 : f32 to vector<16x16x128xf32>
    %76 = arith.maximumf %75, %74 : vector<16x16x128xf32>
    %77 = vector.broadcast %cst_42 : f32 to vector<16x16x128xf32>
    %78 = arith.minimumf %77, %76 : vector<16x16x128xf32>
    %79 = arith.mulf %72, %78 : vector<16x16x128xf32>
    %c0_43 = arith.constant 0 : index
    %c0_44 = arith.constant 0 : index
    %80 = vector.load %arg5[%c0_43, %c0_44] : memref<128x128xf32, #tpu.memory_space<vmem>>, vector<128x128xf32>
    %81 = vector.shape_cast %79 : vector<16x16x128xf32> to vector<256x128xf32>
    %cst_45 = arith.constant dense<0.000000e+00> : vector<256x128xf32>
    %82 = tpu.matmul %81, %80, %cst_45 {dimension_numbers = #tpu.dot_dimension_numbers<[1], [0], [0], [1], [0, 0, 1, 1], [], []>} : vector<256x128xf32>, vector<128x128xf32>, vector<256x128xf32> -> vector<256x128xf32>
    %c0_46 = arith.constant 0 : index
    %c0_47 = arith.constant 0 : index
    %83 = vector.load %arg6[%c0_46, %c0_47] : memref<1x128xf32, #tpu.memory_space<vmem>>, vector<1x128xf32>
    %84 = vector.shape_cast %83 : vector<1x128xf32> to vector<128xf32>
    %85 = vector.shape_cast %84 : vector<128xf32> to vector<1x128xf32>
    %86 = vector.broadcast %85 : vector<1x128xf32> to vector<256x128xf32>
    %87 = arith.addf %82, %86 : vector<256x128xf32>
    %cst_48 = arith.constant 3.000000e+00 : f32
    %88 = vector.broadcast %cst_48 : f32 to vector<256x128xf32>
    %89 = arith.addf %87, %88 : vector<256x128xf32>
    %cst_49 = arith.constant 0.000000e+00 : f32
    %cst_50 = arith.constant 6.000000e+00 : f32
    %90 = vector.broadcast %cst_49 : f32 to vector<256x128xf32>
    %91 = arith.maximumf %90, %89 : vector<256x128xf32>
    %92 = vector.broadcast %cst_50 : f32 to vector<256x128xf32>
    %93 = arith.minimumf %92, %91 : vector<256x128xf32>
    %94 = arith.mulf %87, %93 : vector<256x128xf32>
    %cst_51 = arith.constant 0.166666672 : f32
    %95 = vector.broadcast %cst_51 : f32 to vector<256x128xf32>
    %96 = arith.mulf %94, %95 : vector<256x128xf32>
    %97 = vector.shape_cast %96 : vector<256x128xf32> to vector<16x16x128xf32>
    %c0_52 = arith.constant 0 : index
    %c0_53 = arith.constant 0 : index
    %c0_54 = arith.constant 0 : index
    %c0_55 = arith.constant 0 : index
    %98 = vector.load %arg7[%c0_52, %c0_53, %c0_54, %c0_55] : memref<1x16x16x128xf32, #tpu.memory_space<vmem>>, vector<1x16x16x128xf32>
    %99 = vector.shape_cast %98 : vector<1x16x16x128xf32> to vector<16x16x128xf32>
    %100 = vector.shape_cast %97 : vector<16x16x128xf32> to vector<1x16x16x128xf32>
    tpu.vector_store %arg7[%c0_52, %c0_53, %c0_54, %c0_55], %100 {strides = array<i32>} : memref<1x16x16x128xf32, #tpu.memory_space<vmem>>, vector<1x16x16x128xf32>,
    return
  }
  func.func @transform_0(%arg0: i32, %arg1: i32) -> (i32, i32, i32, i32, i32) {
    %c0_i32 = arith.constant 0 : i32
    %c0_i32_0 = arith.constant 0 : i32
    %c0_i32_1 = arith.constant 0 : i32
    %c0_i32_2 = arith.constant 0 : i32
    return %arg0, %arg1, %c0_i32, %c0_i32_0, %c0_i32_1 : i32, i32, i32, i32, i32
  }
  func.func @transform_1(%arg0: i32, %arg1: i32) -> (i32, i32, i32) {
    %c0_i32 = arith.constant 0 : i32
    %c0_i32_0 = arith.constant 0 : i32
    %c0_i32_1 = arith.constant 0 : i32
    %c0_i32_2 = arith.constant 0 : i32
    return %c0_i32, %c0_i32_0, %c0_i32_1 : i32, i32, i32
  }
  func.func @transform_2(%arg0: i32, %arg1: i32) -> (i32, i32) {
    %c0_i32 = arith.constant 0 : i32
    %c0_i32_0 = arith.constant 0 : i32
    %c0_i32_1 = arith.constant 0 : i32
    return %c0_i32, %c0_i32_0 : i32, i32
  }
  func.func @transform_3(%arg0: i32, %arg1: i32) -> (i32, i32) {
    %c0_i32 = arith.constant 0 : i32
    %c0_i32_0 = arith.constant 0 : i32
    %c0_i32_1 = arith.constant 0 : i32
    return %c0_i32, %c0_i32_0 : i32, i32
  }
  func.func @transform_4(%arg0: i32, %arg1: i32) -> (i32, i32) {
    %c0_i32 = arith.constant 0 : i32
    %c0_i32_0 = arith.constant 0 : i32
    %c0_i32_1 = arith.constant 0 : i32
    return %c0_i32, %c0_i32_0 : i32, i32
  }
  func.func @transform_5(%arg0: i32, %arg1: i32) -> (i32, i32, i32, i32) {
    %c0_i32 = arith.constant 0 : i32
    %c0_i32_0 = arith.constant 0 : i32
    %c0_i32_1 = arith.constant 0 : i32
    return %arg0, %arg1, %c0_i32, %c0_i32_0 : i32, i32, i32, i32
  }
}

</mosaic_0001>

<llo_original>
// kernel: depthwise_separable_forward.1
$region0: #{depthwise_separable_forward.1}
  #allocation0 [shape = 'u32[]', space=smem, size = 0x4, offset = 0x4, fixed_abs, tag = 'smem constant byte address 0x4 - core index']
  #allocation1 [shape = 'u32[72,128]{1,0:T(1,128)}', space=vmem, size = 0x9000, scoped, tag = 'internal scratch']
  %s0 = inlined_call_operand.vmem [shape: f32[2,1,18,18,128], index: 0, kind: input, shape index: {}]
  %s1 = inlined_call_operand.vmem [shape: f32[3,3,128], index: 1, kind: input, shape index: {}]
  %s2 = inlined_call_operand.vmem [shape: f32[1,128], index: 2, kind: input, shape index: {}]
  %s3 = inlined_call_operand.vmem [shape: f32[128,128], index: 3, kind: input, shape index: {}]
  %s4 = inlined_call_operand.vmem [shape: f32[1,128], index: 4, kind: input, shape index: {}]
  %s5 = inlined_call_operand.vmem [shape: f32[2,16,16,128], index: 5, kind: output, shape index: {}]
  %s6 = sld [smem:[#allocation0]]
  $region53: #{depthwise_separable_forward.1} parent=0
    _
  %s8 = ssub.s32 1, %s6
  %s9 = scalar_select 0, %s8, %s6
  loop: start=0, step=1, limit=4
  $region2: #{depthwise_separable_forward.1} parent=0 // loop_pre_header
    _
  $region3: #{depthwise_separable_forward.1} parent=0 // loop_header
    %s11 = sphi 0, %s15
    %p12 = scmp.ge.s32.totalorder %s11, 4
    %s18 = sphi 0, %s30
    %s19 = sphi 0, %s26
    %s20 = sphi 0, %s18
    %s21 = sphi 0, %s19
    %s22 = sphi 0, %s20
    %s23 = sphi 0, %s21
    %s35 = sphi 0, %s37
    %s38 = sphi 0, %s35
    %s39 = sphi 0, %s38
    %s55 = sphi 0, %s39
    %s59 = sphi 0, %s59
    %s61 = sphi 0, %s59
    %s62 = sphi 0, %s61
    %s76 = sphi 0, %s62
    %s80 = sphi 0, %s80
    %s82 = sphi 0, %s80
    %s83 = sphi 0, %s82
    %s97 = sphi 0, %s83
    %s101 = sphi 0, %s101
    %s103 = sphi 0, %s101
    %s104 = sphi 0, %s103
    %s118 = sphi 0, %s104
    %s122 = sphi 0, %s122
    %s124 = sphi 0, %s122
    %s125 = sphi 0, %s124
    %s139 = sphi 0, %s125
    %s147 = sphi 0, %s149
    %s150 = sphi 0, %s147
    %s151 = sphi 0, %s150
    %s167 = sphi 0, %s151
  $region4: #{depthwise_separable_forward.1} parent=0 // loop_header_branch
    %14 = sbr.rel (%p12) target = $region8
  $region5: #{depthwise_separable_forward.1} parent=0 // loop_body
    %s16 = ssub.s32 %s11, 1
    %s17 = ssub.s32 %s11, 2
    %s24 = sadd.s32 1, %s19
    %p25 = scmp.ge.s32.totalorder %s24, 1
    %s26 = scalar_select %p25, 0, %s24
    %s27 = sadd.s32 1, %s18
    %s28 = scalar_select %p25, %s27, %s18
    %p29 = scmp.ge.s32.totalorder %s28, 2
    %s30 = scalar_select %p29, 0, %s28
    %s31 = ssub.s32 %s18, %s30
    %s32 = ssub.s32 %s19, %s26
    %s33 = sor.u32 %s31, %s32
    %p34 = scmp.eq.s32.totalorder %s33, 0
    %s36 = sadd.s32 %s35, 1
    %s37 = scalar_select %p34, %s35, %s36
    %p40 = pneg %p34
    %p41 = scmp.eq.s32.totalorder %s11, 1
    %p42 = por %p40, %p41
    %p43 = scmp.ne.s32.totalorder %s35, %s38
    %p44 = scmp.eq.s32.totalorder %s11, 0
    %p45 = por %p43, %p44
    %p46 = scmp.ne.s32.totalorder %s35, %s38
    %p47 = scmp.eq.s32.totalorder %s16, 1
    %p48 = por %p46, %p47
    %p49 = scmp.ne.s32.totalorder %s38, %s39
    %p50 = scmp.eq.s32.totalorder %s16, 0
    %p51 = por %p49, %p50
    %p52 = scmp.ne.s32.totalorder %s38, %s39
    %p53 = scmp.eq.s32.totalorder %s17, 1
    %p54 = por %p52, %p53
    %p56 = scmp.ne.s32.totalorder %s39, %s55
    %p57 = scmp.eq.s32.totalorder %s17, 0
    %p58 = por %p56, %p57
    %s60 = sadd.s32 %s59, 1
    %p63 = scmp.eq.s32.totalorder %s11, 1
    %p64 = scmp.ne.s32.totalorder %s59, %s61
    %p65 = scmp.eq.s32.totalorder %s11, 0
    %p66 = por %p64, %p65
    %p67 = scmp.ne.s32.totalorder %s59, %s61
    %p68 = scmp.eq.s32.totalorder %s16, 1
    %p69 = por %p67, %p68
    %p70 = scmp.ne.s32.totalorder %s61, %s62
    %p71 = scmp.eq.s32.totalorder %s16, 0
    %p72 = por %p70, %p71
    %p73 = scmp.ne.s32.totalorder %s61, %s62
    %p74 = scmp.eq.s32.totalorder %s17, 1
    %p75 = por %p73, %p74
    %p77 = scmp.ne.s32.totalorder %s62, %s76
    %p78 = scmp.eq.s32.totalorder %s17, 0
    %p79 = por %p77, %p78
    %s81 = sadd.s32 %s80, 1
    %p84 = scmp.eq.s32.totalorder %s11, 1
    %p85 = scmp.ne.s32.totalorder %s80, %s82
    %p86 = scmp.eq.s32.totalorder %s11, 0
    %p87 = por %p85, %p86
    %p88 = scmp.ne.s32.totalorder %s80, %s82
    %p89 = scmp.eq.s32.totalorder %s16, 1
    %p90 = por %p88, %p89
    %p91 = scmp.ne.s32.totalorder %s82, %s83
    %p92 = scmp.eq.s32.totalorder %s16, 0
    %p93 = por %p91, %p92
    %p94 = scmp.ne.s32.totalorder %s82, %s83
    %p95 = scmp.eq.s32.totalorder %s17, 1
    %p96 = por %p94, %p95
    %p98 = scmp.ne.s32.totalorder %s83, %s97
    %p99 = scmp.eq.s32.totalorder %s17, 0
    %p100 = por %p98, %p99
    %s102 = sadd.s32 %s101, 1
    %p105 = scmp.eq.s32.totalorder %s11, 1
    %p106 = scmp.ne.s32.totalorder %s101, %s103
    %p107 = scmp.eq.s32.totalorder %s11, 0
    %p108 = por %p106, %p107
    %p109 = scmp.ne.s32.totalorder %s101, %s103
    %p110 = scmp.eq.s32.totalorder %s16, 1
    %p111 = por %p109, %p110
    %p112 = scmp.ne.s32.totalorder %s103, %s104
    %p113 = scmp.eq.s32.totalorder %s16, 0
    %p114 = por %p112, %p113
    %p115 = scmp.ne.s32.totalorder %s103, %s104
    %p116 = scmp.eq.s32.totalorder %s17, 1
    %p117 = por %p115, %p116
    %p119 = scmp.ne.s32.totalorder %s104, %s118
    %p120 = scmp.eq.s32.totalorder %s17, 0
    %p121 = por %p119, %p120
    %s123 = sadd.s32 %s122, 1
    %p126 = scmp.eq.s32.totalorder %s11, 1
    %p127 = scmp.ne.s32.totalorder %s122, %s124
    %p128 = scmp.eq.s32.totalorder %s11, 0
    %p129 = por %p127, %p128
    %p130 = scmp.ne.s32.totalorder %s122, %s124
    %p131 = scmp.eq.s32.totalorder %s16, 1
    %p132 = por %p130, %p131
    %p133 = scmp.ne.s32.totalorder %s124, %s125
    %p134 = scmp.eq.s32.totalorder %s16, 0
    %p135 = por %p133, %p134
    %p136 = scmp.ne.s32.totalorder %s124, %s125
    %p137 = scmp.eq.s32.totalorder %s17, 1
    %p138 = por %p136, %p137
    %p140 = scmp.ne.s32.totalorder %s125, %s139
    %p141 = scmp.eq.s32.totalorder %s17, 0
    %p142 = por %p140, %p141
    %s143 = ssub.s32 %s18, %s30
    %s144 = ssub.s32 %s19, %s26
    %s145 = sor.u32 %s143, %s144
    %p146 = scmp.eq.s32.totalorder %s145, 0
    %s148 = sadd.s32 %s147, 1
    %s149 = scalar_select %p146, %s147, %s148
    %p152 = pneg %p146
    %p153 = scmp.eq.s32.totalorder %s11, 1
    %p154 = por %p152, %p153
    %p155 = scmp.ne.s32.totalorder %s147, %s150
    %p156 = scmp.eq.s32.totalorder %s11, 0
    %p157 = por %p155, %p156
    %p158 = scmp.ne.s32.totalorder %s147, %s150
    %p159 = scmp.eq.s32.totalorder %s16, 1
    %p160 = por %p158, %p159
    %p161 = scmp.ne.s32.totalorder %s150, %s151
    %p162 = scmp.eq.s32.totalorder %s16, 0
    %p163 = por %p161, %p162
    %p164 = scmp.ne.s32.totalorder %s150, %s151
    %p165 = scmp.eq.s32.totalorder %s17, 1
    %p166 = por %p164, %p165
    %p168 = scmp.ne.s32.totalorder %s151, %s167
    %p169 = scmp.eq.s32.totalorder %s17, 0
    %p170 = por %p168, %p169
    %p171 = scmp.le.s32.totalorder 1, %s11
    %p172 = scmp.lt.s32.totalorder %s11, 3
    %p173 = pnand %p171, %p172
    %p174 = pneg %p173
    // Predicated region
    $region9: #{depthwise_separable_forward.1} parent=5 // pred_check
      _
    $region10: #{depthwise_separable_forward.1} parent=5 // pred_check_branch
      %176 = sbr.rel (%p173) target = $region12
    $region11: #{depthwise_separable_forward.1} parent=5 // pred_region
      %s177 = ssub.s32 %s11, 1
      // Predicated region
      $region13: #{depthwise_separable_forward.1} parent=11 // pred_check
        %p178 = pneg %p72
      $region14: #{depthwise_separable_forward.1} parent=11 // pred_check_branch
        %180 = sbr.rel (%p178) target = $region16
      $region15: #{depthwise_separable_forward.1} parent=11 // pred_region
        _
      $region16: #{depthwise_separable_forward.1} parent=11 // pred_fallthru
        _
      // Predicated region
      $region17: #{depthwise_separable_forward.1} parent=11 // pred_check
        %p181 = pneg %p93
      $region18: #{depthwise_separable_forward.1} parent=11 // pred_check_branch
        %183 = sbr.rel (%p181) target = $region20
      $region19: #{depthwise_separable_forward.1} parent=11 // pred_region
        _
      $region20: #{depthwise_separable_forward.1} parent=11 // pred_fallthru
        _
      // Predicated region
      $region21: #{depthwise_separable_forward.1} parent=11 // pred_check
        %p184 = pneg %p114
      $region22: #{depthwise_separable_forward.1} parent=11 // pred_check_branch
        %186 = sbr.rel (%p184) target = $region24
      $region23: #{depthwise_separable_forward.1} parent=11 // pred_region
        _
      $region24: #{depthwise_separable_forward.1} parent=11 // pred_fallthru
        _
      // Predicated region
      $region25: #{depthwise_separable_forward.1} parent=11 // pred_check
        %p187 = pneg %p135
      $region26: #{depthwise_separable_forward.1} parent=11 // pred_check_branch
        %189 = sbr.rel (%p187) target = $region28
      $region27: #{depthwise_separable_forward.1} parent=11 // pred_region
        _
      $region28: #{depthwise_separable_forward.1} parent=11 // pred_fallthru
        _
    $region12: #{depthwise_separable_forward.1} parent=5 // pred_fallthru
      _
    %p190 = scmp.lt.s32.totalorder %s11, 2
    // Predicated region
    $region29: #{depthwise_separable_forward.1} parent=5 // pred_check
      %p191 = pneg %p190
    $region30: #{depthwise_separable_forward.1} parent=5 // pred_check_branch
      %193 = sbr.rel (%p191) target = $region32
    $region31: #{depthwise_separable_forward.1} parent=5 // pred_region
      // Predicated region
      $region33: #{depthwise_separable_forward.1} parent=31 // pred_check
        %p194 = pneg %p45
      $region34: #{depthwise_separable_forward.1} parent=31 // pred_check_branch
        %196 = sbr.rel (%p194) target = $region36
      $region35: #{depthwise_separable_forward.1} parent=31 // pred_region
        %p197 = scmp.lt.s32.totalorder %s18, 1
        %s198 = scalar_select %p197, %s18, 1
        %p199 = scmp.lt.s32.totalorder %s19, 0
        %s200 = scalar_select %p199, %s19, 0
        %s201 = smul.addr %s200, 54
        %s202 = smul.addr %s198, 54
        %s203 = sadd.s32 %s201, %s202
        %s204 = smul.addr %s203, 8
        %s205 = scalar_lea.vmem %s0, %s204
      $region36: #{depthwise_separable_forward.1} parent=31 // pred_fallthru
        _
    $region32: #{depthwise_separable_forward.1} parent=5 // pred_fallthru
      _
    %p206 = scmp.le.s32.totalorder 1, %s11
    %p207 = scmp.lt.s32.totalorder %s11, 3
    %p208 = pnand %p206, %p207
    %p209 = pneg %p208
    // Predicated region
    $region37: #{depthwise_separable_forward.1} parent=5 // pred_check
      _
    $region38: #{depthwise_separable_forward.1} parent=5 // pred_check_branch
      %211 = sbr.rel (%p208) target = $region40
    $region39: #{depthwise_separable_forward.1} parent=5 // pred_region
      %s212 = ssub.s32 %s11, 1
      %p213 = scmp.lt.s32.totalorder %s20, 1
      %s214 = scalar_select %p213, %s20, 1
      %p215 = scmp.lt.s32.totalorder %s21, 0
      %s216 = scalar_select %p215, %s21, 0
      %s217 = smul.addr %s216, 54
      %s218 = smul.addr %s214, 54
      %s219 = sadd.s32 %s217, %s218
      %s220 = smul.addr %s219, 8
      %s221 = scalar_lea.vmem %s0, %s220
      %p222 = pneg %p51
      %p223 = pneg %p48
      %p224 = pneg %p72
      %p225 = pneg %p69
      %p226 = pneg %p93
      %p227 = pneg %p90
      %p228 = pneg %p114
      %p229 = pneg %p111
      %p230 = pneg %p135
      %p231 = pneg %p132
      %p232 = pneg %p163
      %p233 = pneg %p160
      %s234 = smul.u32 16, %s21
      %p235 = scmp.lt.s32.totalorder %s20, 1
      %s236 = scalar_select %p235, %s20, 1
      %p237 = scmp.lt.s32.totalorder %s234, 15
      %s238 = scalar_select %p237, %s234, 15
      %s239 = smul.addr %s238, 2
      %s240 = smul.addr %s236, 32
      %s241 = sadd.s32 %s239, %s240
      %s242 = smul.addr %s241, 8
      %s243 = scalar_lea.vmem %s5, %s242
      %p244 = scmp.lt.s32.totalorder %s20, 1
      %s245 = scalar_select %p244, %s20, 1
      %p246 = scmp.lt.s32.totalorder %s21, 0
      %s247 = scalar_select %p246, %s21, 0
      %s248 = smul.addr %s247, 54
      %s249 = smul.addr %s245, 54
      %s250 = sadd.s32 %s248, %s249
      %s251 = smul.addr %s250, 8
      %s252 = scalar_lea.vmem %s0, %s251
      %s253 = smul.u32 16, %s21
      %p254 = scmp.lt.s32.totalorder %s20, 1
      %s255 = scalar_select %p254, %s20, 1
      %p256 = scmp.lt.s32.totalorder %s253, 15
      %s257 = scalar_select %p256, %s253, 15
      %s258 = smul.addr %s257, 2
      %s259 = smul.addr %s255, 32
      %s260 = sadd.s32 %s258, %s259
      %s261 = smul.addr %s260, 8
      %s262 = scalar_lea.vmem %s5, %s261
      %s263 = smul.u32 16, %s21
      %v264 = vld [vmem:[%s252] sm:$0xff]
      %v265 = vld [vmem:[%s252 + $0x8] sm:$0xff]
      %v266 = vld [vmem:[%s252 + $0x10] sm:$0x3]
      %v267 = vld [vmem:[%s252 + $0x18] sm:$0xff]
      %v268 = vld [vmem:[%s252 + $0x20] sm:$0xff]
      %v269 = vld [vmem:[%s252 + $0x28] sm:$0x3]
      %v270 = vld [vmem:[%s252 + $0x30] sm:$0xff]
      %v271 = vld [vmem:[%s252 + $0x38] sm:$0xff]
      %v272 = vld [vmem:[%s252 + $0x40] sm:$0x3]
      %v273 = vld [vmem:[%s252 + $0x48] sm:$0xff]
      %v274 = vld [vmem:[%s252 + $0x50] sm:$0xff]
      %v275 = vld [vmem:[%s252 + $0x58] sm:$0x3]
      %v276 = vld [vmem:[%s252 + $0x60] sm:$0xff]
      %v277 = vld [vmem:[%s252 + $0x68] sm:$0xff]
      %v278 = vld [vmem:[%s252 + $0x70] sm:$0x3]
      %v279 = vld [vmem:[%s252 + $0x78] sm:$0xff]
      %v280 = vld [vmem:[%s252 + $0x80] sm:$0xff]
      %v281 = vld [vmem:[%s252 + $0x88] sm:$0x3]
      %v282 = vld [vmem:[%s252 + $0x90] sm:$0xff]
      %v283 = vld [vmem:[%s252 + $0x98] sm:$0xff]
      %v284 = vld [vmem:[%s252 + $0xa0] sm:$0x3]
      %v285 = vld [vmem:[%s252 + $0xa8] sm:$0xff]
      %v286 = vld [vmem:[%s252 + $0xb0] sm:$0xff]
      %v287 = vld [vmem:[%s252 + $0xb8] sm:$0x3]
      %v288 = vld [vmem:[%s252 + $0xc0] sm:$0xff]
      %v289 = vld [vmem:[%s252 + $0xc8] sm:$0xff]
      %v290 = vld [vmem:[%s252 + $0xd0] sm:$0x3]
      %v291 = vld [vmem:[%s252 + $0xd8] sm:$0xff]
      %v292 = vld [vmem:[%s252 + $0xe0] sm:$0xff]
      %v293 = vld [vmem:[%s252 + $0xe8] sm:$0x3]
      %v294 = vld [vmem:[%s252 + $0xf0] sm:$0xff]
      %v295 = vld [vmem:[%s252 + $0xf8] sm:$0xff]
      %v296 = vld [vmem:[%s252 + $0x100] sm:$0x3]
      %v297 = vld [vmem:[%s252 + $0x108] sm:$0xff]
      %v298 = vld [vmem:[%s252 + $0x110] sm:$0xff]
      %v299 = vld [vmem:[%s252 + $0x118] sm:$0x3]
      %v300 = vld [vmem:[%s252 + $0x120] sm:$0xff]
      %v301 = vld [vmem:[%s252 + $0x128] sm:$0xff]
      %v302 = vld [vmem:[%s252 + $0x130] sm:$0x3]
      %v303 = vld [vmem:[%s252 + $0x138] sm:$0xff]
      %v304 = vld [vmem:[%s252 + $0x140] sm:$0xff]
      %v305 = vld [vmem:[%s252 + $0x148] sm:$0x3]
      %v306 = vld [vmem:[%s252 + $0x150] sm:$0xff]
      %v307 = vld [vmem:[%s252 + $0x158] sm:$0xff]
      %v308 = vld [vmem:[%s252 + $0x160] sm:$0x3]
      %v309 = vld [vmem:[%s252 + $0x168] sm:$0xff]
      %v310 = vld [vmem:[%s252 + $0x170] sm:$0xff]
      %v311 = vld [vmem:[%s252 + $0x178] sm:$0x3]
      %v312 = vld [vmem:[%s1] sm:$0x1]
      %v313 = vperm.slane %v312, 0
      %v314 = vmul.f32 %v264, %v313
      %v315 = vmul.f32 %v265, %v313
      %v316 = vmul.f32 %v267, %v313
      %v317 = vmul.f32 %v268, %v313
      %v318 = vmul.f32 %v270, %v313
      %v319 = vmul.f32 %v271, %v313
      %v320 = vmul.f32 %v273, %v313
      %v321 = vmul.f32 %v274, %v313
      %v322 = vmul.f32 %v276, %v313
      %v323 = vmul.f32 %v277, %v313
      %v324 = vmul.f32 %v279, %v313
      %v325 = vmul.f32 %v280, %v313
      %v326 = vmul.f32 %v282, %v313
      %v327 = vmul.f32 %v283, %v313
      %v328 = vmul.f32 %v285, %v313
      %v329 = vmul.f32 %v286, %v313
      %v330 = vmul.f32 %v288, %v313
      %v331 = vmul.f32 %v289, %v313
      %v332 = vmul.f32 %v291, %v313
      %v333 = vmul.f32 %v292, %v313
      %v334 = vmul.f32 %v294, %v313
      %v335 = vmul.f32 %v295, %v313
      %v336 = vmul.f32 %v297, %v313
      %v337 = vmul.f32 %v298, %v313
      %v338 = vmul.f32 %v300, %v313
      %v339 = vmul.f32 %v301, %v313
      %v340 = vmul.f32 %v303, %v313
      %v341 = vmul.f32 %v304, %v313
      %v342 = vmul.f32 %v306, %v313
      %v343 = vmul.f32 %v307, %v313
      %v344 = vmul.f32 %v309, %v313
      %v345 = vmul.f32 %v310, %v313
      %v346 = vld [vmem:[%s1 + $0x1] sm:$0x1]
      %v347 = vperm.slane %v346, 0
      %v348 = vmul.f32 %v264, %v347
      %v349 = vmul.f32 %v265, %v347
      %v350 = vmul.f32 %v266, %v347
      %v351 = vmul.f32 %v267, %v347
      %v352 = vmul.f32 %v268, %v347
      %v353 = vmul.f32 %v269, %v347
      %v354 = vmul.f32 %v270, %v347
      %v355 = vmul.f32 %v271, %v347
      %v356 = vmul.f32 %v272, %v347
      %v357 = vmul.f32 %v273, %v347
      %v358 = vmul.f32 %v274, %v347
      %v359 = vmul.f32 %v275, %v347
      %v360 = vmul.f32 %v276, %v347
      %v361 = vmul.f32 %v277, %v347
      %v362 = vmul.f32 %v278, %v347
      %v363 = vmul.f32 %v279, %v347
      %v364 = vmul.f32 %v280, %v347
      %v365 = vmul.f32 %v281, %v347
      %v366 = vmul.f32 %v282, %v347
      %v367 = vmul.f32 %v283, %v347
      %v368 = vmul.f32 %v284, %v347
      %v369 = vmul.f32 %v285, %v347
      %v370 = vmul.f32 %v286, %v347
      %v371 = vmul.f32 %v287, %v347
      %v372 = vmul.f32 %v288, %v347
      %v373 = vmul.f32 %v289, %v347
      %v374 = vmul.f32 %v290, %v347
      %v375 = vmul.f32 %v291, %v347
      %v376 = vmul.f32 %v292, %v347
      %v377 = vmul.f32 %v293, %v347
      %v378 = vmul.f32 %v294, %v347
      %v379 = vmul.f32 %v295, %v347
      %v380 = vmul.f32 %v296, %v347
      %v381 = vmul.f32 %v297, %v347
      %v382 = vmul.f32 %v298, %v347
      %v383 = vmul.f32 %v299, %v347
      %v384 = vmul.f32 %v300, %v347
      %v385 = vmul.f32 %v301, %v347
      %v386 = vmul.f32 %v302, %v347
      %v387 = vmul.f32 %v303, %v347
      %v388 = vmul.f32 %v304, %v347
      %v389 = vmul.f32 %v305, %v347
      %v390 = vmul.f32 %v306, %v347
      %v391 = vmul.f32 %v307, %v347
      %v392 = vmul.f32 %v308, %v347
      %v393 = vmul.f32 %v309, %v347
      %v394 = vmul.f32 %v310, %v347
      %v395 = vmul.f32 %v311, %v347
      %vm444 = vcmask 1046528
      %v445 = vrot.slane %v348, 1
      %v446 = vrot.slane %v349, 1
      %v447 = vsel %vm444, %v445, %v446
      %v448 = vrot.slane %v350, 1
      %v449 = vsel %vm444, %v446, %v448
      %v450 = vrot.slane %v351, 1
      %v451 = vrot.slane %v352, 1
      %v452 = vsel %vm444, %v450, %v451
      %v453 = vrot.slane %v353, 1
      %v454 = vsel %vm444, %v451, %v453
      %v455 = vrot.slane %v354, 1
      %v456 = vrot.slane %v355, 1
      %v457 = vsel %vm444, %v455, %v456
      %v458 = vrot.slane %v356, 1
      %v459 = vsel %vm444, %v456, %v458
      %v460 = vrot.slane %v357, 1
      %v461 = vrot.slane %v358, 1
      %v462 = vsel %vm444, %v460, %v461
      %v463 = vrot.slane %v359, 1
      %v464 = vsel %vm444, %v461, %v463
      %v465 = vrot.slane %v360, 1
      %v466 = vrot.slane %v361, 1
      %v467 = vsel %vm444, %v465, %v466
      %v468 = vrot.slane %v362, 1
      %v469 = vsel %vm444, %v466, %v468
      %v470 = vrot.slane %v363, 1
      %v471 = vrot.slane %v364, 1
      %v472 = vsel %vm444, %v470, %v471
      %v473 = vrot.slane %v365, 1
      %v474 = vsel %vm444, %v471, %v473
      %v475 = vrot.slane %v366, 1
      %v476 = vrot.slane %v367, 1
      %v477 = vsel %vm444, %v475, %v476
      %v478 = vrot.slane %v368, 1
      %v479 = vsel %vm444, %v476, %v478
      %v480 = vrot.slane %v369, 1
      %v481 = vrot.slane %v370, 1
      %v482 = vsel %vm444, %v480, %v481
      %v483 = vrot.slane %v371, 1
      %v484 = vsel %vm444, %v481, %v483
      %v485 = vrot.slane %v372, 1
      %v486 = vrot.slane %v373, 1
      %v487 = vsel %vm444, %v485, %v486
      %v488 = vrot.slane %v374, 1
      %v489 = vsel %vm444, %v486, %v488
      %v490 = vrot.slane %v375, 1
      %v491 = vrot.slane %v376, 1
      %v492 = vsel %vm444, %v490, %v491
      %v493 = vrot.slane %v377, 1
      %v494 = vsel %vm444, %v491, %v493
      %v495 = vrot.slane %v378, 1
      %v496 = vrot.slane %v379, 1
      %v497 = vsel %vm444, %v495, %v496
      %v498 = vrot.slane %v380, 1
      %v499 = vsel %vm444, %v496, %v498
      %v500 = vrot.slane %v381, 1
      %v501 = vrot.slane %v382, 1
      %v502 = vsel %vm444, %v500, %v501
      %v503 = vrot.slane %v383, 1
      %v504 = vsel %vm444, %v501, %v503
      %v505 = vrot.slane %v384, 1
      %v506 = vrot.slane %v385, 1
      %v507 = vsel %vm444, %v505, %v506
      %v508 = vrot.slane %v386, 1
      %v509 = vsel %vm444, %v506, %v508
      %v510 = vrot.slane %v387, 1
      %v511 = vrot.slane %v388, 1
      %v512 = vsel %vm444, %v510, %v511
      %v513 = vrot.slane %v389, 1
      %v514 = vsel %vm444, %v511, %v513
      %v515 = vrot.slane %v390, 1
      %v516 = vrot.slane %v391, 1
      %v517 = vsel %vm444, %v515, %v516
      %v518 = vrot.slane %v392, 1
      %v519 = vsel %vm444, %v516, %v518
      %v520 = vrot.slane %v393, 1
      %v521 = vrot.slane %v394, 1
      %v522 = vsel %vm444, %v520, %v521
      %v523 = vrot.slane %v395, 1
      %v524 = vsel %vm444, %v521, %v523
      %v557 = vadd.f32 %v314, %v447
      %v558 = vadd.f32 %v315, %v449
      %v559 = vadd.f32 %v316, %v452
      %v560 = vadd.f32 %v317, %v454
      %v561 = vadd.f32 %v318, %v457
      %v562 = vadd.f32 %v319, %v459
      %v563 = vadd.f32 %v320, %v462
      %v564 = vadd.f32 %v321, %v464
      %v565 = vadd.f32 %v322, %v467
      %v566 = vadd.f32 %v323, %v469
      %v567 = vadd.f32 %v324, %v472
      %v568 = vadd.f32 %v325, %v474
      %v569 = vadd.f32 %v326, %v477
      %v570 = vadd.f32 %v327, %v479
      %v571 = vadd.f32 %v328, %v482
      %v572 = vadd.f32 %v329, %v484
      %v573 = vadd.f32 %v330, %v487
      %v574 = vadd.f32 %v331, %v489
      %v575 = vadd.f32 %v332, %v492
      %v576 = vadd.f32 %v333, %v494
      %v577 = vadd.f32 %v334, %v497
      %v578 = vadd.f32 %v335, %v499
      %v579 = vadd.f32 %v336, %v502
      %v580 = vadd.f32 %v337, %v504
      %v581 = vadd.f32 %v338, %v507
      %v582 = vadd.f32 %v339, %v509
      %v583 = vadd.f32 %v340, %v512
      %v584 = vadd.f32 %v341, %v514
      %v585 = vadd.f32 %v342, %v517
      %v586 = vadd.f32 %v343, %v519
      %v587 = vadd.f32 %v344, %v522
      %v588 = vadd.f32 %v345, %v524
      %v589 = vld [vmem:[%s1 + $0x2] sm:$0x1]
      %v590 = vperm.slane %v589, 0
      %v591 = vmul.f32 %v264, %v590
      %v592 = vmul.f32 %v265, %v590
      %v593 = vmul.f32 %v266, %v590
      %v594 = vmul.f32 %v267, %v590
      %v595 = vmul.f32 %v268, %v590
      %v596 = vmul.f32 %v269, %v590
      %v597 = vmul.f32 %v270, %v590
      %v598 = vmul.f32 %v271, %v590
      %v599 = vmul.f32 %v272, %v590
      %v600 = vmul.f32 %v273, %v590
      %v601 = vmul.f32 %v274, %v590
      %v602 = vmul.f32 %v275, %v590
      %v603 = vmul.f32 %v276, %v590
      %v604 = vmul.f32 %v277, %v590
      %v605 = vmul.f32 %v278, %v590
      %v606 = vmul.f32 %v279, %v590
      %v607 = vmul.f32 %v280, %v590
      %v608 = vmul.f32 %v281, %v590
      %v609 = vmul.f32 %v282, %v590
      %v610 = vmul.f32 %v283, %v590
      %v611 = vmul.f32 %v284, %v590
      %v612 = vmul.f32 %v285, %v590
      %v613 = vmul.f32 %v286, %v590
      %v614 = vmul.f32 %v287, %v590
      %v615 = vmul.f32 %v288, %v590
      %v616 = vmul.f32 %v289, %v590
      %v617 = vmul.f32 %v290, %v590
      %v618 = vmul.f32 %v291, %v590
      %v619 = vmul.f32 %v292, %v590
      %v620 = vmul.f32 %v293, %v590
      %v621 = vmul.f32 %v294, %v590
      %v622 = vmul.f32 %v295, %v590
      %v623 = vmul.f32 %v296, %v590
      %v624 = vmul.f32 %v297, %v590
      %v625 = vmul.f32 %v298, %v590
      %v626 = vmul.f32 %v299, %v590
      %v627 = vmul.f32 %v300, %v590
      %v628 = vmul.f32 %v301, %v590
      %v629 = vmul.f32 %v302, %v590
      %v630 = vmul.f32 %v303, %v590
      %v631 = vmul.f32 %v304, %v590
      %v632 = vmul.f32 %v305, %v590
      %v633 = vmul.f32 %v306, %v590
      %v634 = vmul.f32 %v307, %v590
      %v635 = vmul.f32 %v308, %v590
      %v636 = vmul.f32 %v309, %v590
      %v637 = vmul.f32 %v310, %v590
      %v638 = vmul.f32 %v311, %v590
      %vm687 = vcmask 1045504
      %v688 = vrot.slane %v591, 2
      %v689 = vrot.slane %v592, 2
      %v690 = vsel %vm687, %v688, %v689
      %v691 = vrot.slane %v593, 2
      %v692 = vsel %vm687, %v689, %v691
      %v693 = vrot.slane %v594, 2
      %v694 = vrot.slane %v595, 2
      %v695 = vsel %vm687, %v693, %v694
      %v696 = vrot.slane %v596, 2
      %v697 = vsel %vm687, %v694, %v696
      %v698 = vrot.slane %v597, 2
      %v699 = vrot.slane %v598, 2
      %v700 = vsel %vm687, %v698, %v699
      %v701 = vrot.slane %v599, 2
      %v702 = vsel %vm687, %v699, %v701
      %v703 = vrot.slane %v600, 2
      %v704 = vrot.slane %v601, 2
      %v705 = vsel %vm687, %v703, %v704
      %v706 = vrot.slane %v602, 2
      %v707 = vsel %vm687, %v704, %v706
      %v708 = vrot.slane %v603, 2
      %v709 = vrot.slane %v604, 2
      %v710 = vsel %vm687, %v708, %v709
      %v711 = vrot.slane %v605, 2
      %v712 = vsel %vm687, %v709, %v711
      %v713 = vrot.slane %v606, 2
      %v714 = vrot.slane %v607, 2
      %v715 = vsel %vm687, %v713, %v714
      %v716 = vrot.slane %v608, 2
      %v717 = vsel %vm687, %v714, %v716
      %v718 = vrot.slane %v609, 2
      %v719 = vrot.slane %v610, 2
      %v720 = vsel %vm687, %v718, %v719
      %v721 = vrot.slane %v611, 2
      %v722 = vsel %vm687, %v719, %v721
      %v723 = vrot.slane %v612, 2
      %v724 = vrot.slane %v613, 2
      %v725 = vsel %vm687, %v723, %v724
      %v726 = vrot.slane %v614, 2
      %v727 = vsel %vm687, %v724, %v726
      %v728 = vrot.slane %v615, 2
      %v729 = vrot.slane %v616, 2
      %v730 = vsel %vm687, %v728, %v729
      %v731 = vrot.slane %v617, 2
      %v732 = vsel %vm687, %v729, %v731
      %v733 = vrot.slane %v618, 2
      %v734 = vrot.slane %v619, 2
      %v735 = vsel %vm687, %v733, %v734
      %v736 = vrot.slane %v620, 2
      %v737 = vsel %vm687, %v734, %v736
      %v738 = vrot.slane %v621, 2
      %v739 = vrot.slane %v622, 2
      %v740 = vsel %vm687, %v738, %v739
      %v741 = vrot.slane %v623, 2
      %v742 = vsel %vm687, %v739, %v741
      %v743 = vrot.slane %v624, 2
      %v744 = vrot.slane %v625, 2
      %v745 = vsel %vm687, %v743, %v744
      %v746 = vrot.slane %v626, 2
      %v747 = vsel %vm687, %v744, %v746
      %v748 = vrot.slane %v627, 2
      %v749 = vrot.slane %v628, 2
      %v750 = vsel %vm687, %v748, %v749
      %v751 = vrot.slane %v629, 2
      %v752 = vsel %vm687, %v749, %v751
      %v753 = vrot.slane %v630, 2
      %v754 = vrot.slane %v631, 2
      %v755 = vsel %vm687, %v753, %v754
      %v756 = vrot.slane %v632, 2
      %v757 = vsel %vm687, %v754, %v756
      %v758 = vrot.slane %v633, 2
      %v759 = vrot.slane %v634, 2
      %v760 = vsel %vm687, %v758, %v759
      %v761 = vrot.slane %v635, 2
      %v762 = vsel %vm687, %v759, %v761
      %v763 = vrot.slane %v636, 2
      %v764 = vrot.slane %v637, 2
      %v765 = vsel %vm687, %v763, %v764
      %v766 = vrot.slane %v638, 2
      %v767 = vsel %vm687, %v764, %v766
      %v800 = vadd.f32 %v557, %v690
      %v801 = vadd.f32 %v558, %v692
      %v802 = vadd.f32 %v559, %v695
      %v803 = vadd.f32 %v560, %v697
      %v804 = vadd.f32 %v561, %v700
      %v805 = vadd.f32 %v562, %v702
      %v806 = vadd.f32 %v563, %v705
      %v807 = vadd.f32 %v564, %v707
      %v808 = vadd.f32 %v565, %v710
      %v809 = vadd.f32 %v566, %v712
      %v810 = vadd.f32 %v567, %v715
      %v811 = vadd.f32 %v568, %v717
      %v812 = vadd.f32 %v569, %v720
      %v813 = vadd.f32 %v570, %v722
      %v814 = vadd.f32 %v571, %v725
      %v815 = vadd.f32 %v572, %v727
      %v816 = vadd.f32 %v573, %v730
      %v817 = vadd.f32 %v574, %v732
      %v818 = vadd.f32 %v575, %v735
      %v819 = vadd.f32 %v576, %v737
      %v820 = vadd.f32 %v577, %v740
      %v821 = vadd.f32 %v578, %v742
      %v822 = vadd.f32 %v579, %v745
      %v823 = vadd.f32 %v580, %v747
      %v824 = vadd.f32 %v581, %v750
      %v825 = vadd.f32 %v582, %v752
      %v826 = vadd.f32 %v583, %v755
      %v827 = vadd.f32 %v584, %v757
      %v828 = vadd.f32 %v585, %v760
      %v829 = vadd.f32 %v586, %v762
      %v830 = vadd.f32 %v587, %v765
      %v831 = vadd.f32 %v588, %v767
      %s832 = scalar_lea.vmem %s252, 24
      %v833 = vld [vmem:[%s832] sm:$0xff]
      %v834 = vld [vmem:[%s832 + $0x8] sm:$0xff]
      %v835 = vld [vmem:[%s832 + $0x10] sm:$0x3]
      %v836 = vld [vmem:[%s832 + $0x18] sm:$0xff]
      %v837 = vld [vmem:[%s832 + $0x20] sm:$0xff]
      %v838 = vld [vmem:[%s832 + $0x28] sm:$0x3]
      %v839 = vld [vmem:[%s832 + $0x30] sm:$0xff]
      %v840 = vld [vmem:[%s832 + $0x38] sm:$0xff]
      %v841 = vld [vmem:[%s832 + $0x40] sm:$0x3]
      %v842 = vld [vmem:[%s832 + $0x48] sm:$0xff]
      %v843 = vld [vmem:[%s832 + $0x50] sm:$0xff]
      %v844 = vld [vmem:[%s832 + $0x58] sm:$0x3]
      %v845 = vld [vmem:[%s832 + $0x60] sm:$0xff]
      %v846 = vld [vmem:[%s832 + $0x68] sm:$0xff]
      %v847 = vld [vmem:[%s832 + $0x70] sm:$0x3]
      %v848 = vld [vmem:[%s832 + $0x78] sm:$0xff]
      %v849 = vld [vmem:[%s832 + $0x80] sm:$0xff]
      %v850 = vld [vmem:[%s832 + $0x88] sm:$0x3]
      %v851 = vld [vmem:[%s832 + $0x90] sm:$0xff]
      %v852 = vld [vmem:[%s832 + $0x98] sm:$0xff]
      %v853 = vld [vmem:[%s832 + $0xa0] sm:$0x3]
      %v854 = vld [vmem:[%s832 + $0xa8] sm:$0xff]
      %v855 = vld [vmem:[%s832 + $0xb0] sm:$0xff]
      %v856 = vld [vmem:[%s832 + $0xb8] sm:$0x3]
      %v857 = vld [vmem:[%s832 + $0xc0] sm:$0xff]
      %v858 = vld [vmem:[%s832 + $0xc8] sm:$0xff]
      %v859 = vld [vmem:[%s832 + $0xd0] sm:$0x3]
      %v860 = vld [vmem:[%s832 + $0xd8] sm:$0xff]
      %v861 = vld [vmem:[%s832 + $0xe0] sm:$0xff]
      %v862 = vld [vmem:[%s832 + $0xe8] sm:$0x3]
      %v863 = vld [vmem:[%s832 + $0xf0] sm:$0xff]
      %v864 = vld [vmem:[%s832 + $0xf8] sm:$0xff]
      %v865 = vld [vmem:[%s832 + $0x100] sm:$0x3]
      %v866 = vld [vmem:[%s832 + $0x108] sm:$0xff]
      %v867 = vld [vmem:[%s832 + $0x110] sm:$0xff]
      %v868 = vld [vmem:[%s832 + $0x118] sm:$0x3]
      %v869 = vld [vmem:[%s832 + $0x120] sm:$0xff]
      %v870 = vld [vmem:[%s832 + $0x128] sm:$0xff]
      %v871 = vld [vmem:[%s832 + $0x130] sm:$0x3]
      %v872 = vld [vmem:[%s832 + $0x138] sm:$0xff]
      %v873 = vld [vmem:[%s832 + $0x140] sm:$0xff]
      %v874 = vld [vmem:[%s832 + $0x148] sm:$0x3]
      %v875 = vld [vmem:[%s832 + $0x150] sm:$0xff]
      %v876 = vld [vmem:[%s832 + $0x158] sm:$0xff]
      %v877 = vld [vmem:[%s832 + $0x160] sm:$0x3]
      %v878 = vld [vmem:[%s832 + $0x168] sm:$0xff]
      %v879 = vld [vmem:[%s832 + $0x170] sm:$0xff]
      %v880 = vld [vmem:[%s832 + $0x178] sm:$0x3]
      %s881 = scalar_lea.vmem %s1, 4
      %v882 = vld [vmem:[%s881] sm:$0x1]
      %v883 = vperm.slane %v882, 0
      %v884 = vmul.f32 %v833, %v883
      %v885 = vmul.f32 %v834, %v883
      %v886 = vmul.f32 %v836, %v883
      %v887 = vmul.f32 %v837, %v883
      %v888 = vmul.f32 %v839, %v883
      %v889 = vmul.f32 %v840, %v883
      %v890 = vmul.f32 %v842, %v883
      %v891 = vmul.f32 %v843, %v883
      %v892 = vmul.f32 %v845, %v883
      %v893 = vmul.f32 %v846, %v883
      %v894 = vmul.f32 %v848, %v883
      %v895 = vmul.f32 %v849, %v883
      %v896 = vmul.f32 %v851, %v883
      %v897 = vmul.f32 %v852, %v883
      %v898 = vmul.f32 %v854, %v883
      %v899 = vmul.f32 %v855, %v883
      %v900 = vmul.f32 %v857, %v883
      %v901 = vmul.f32 %v858, %v883
      %v902 = vmul.f32 %v860, %v883
      %v903 = vmul.f32 %v861, %v883
      %v904 = vmul.f32 %v863, %v883
      %v905 = vmul.f32 %v864, %v883
      %v906 = vmul.f32 %v866, %v883
      %v907 = vmul.f32 %v867, %v883
      %v908 = vmul.f32 %v869, %v883
      %v909 = vmul.f32 %v870, %v883
      %v910 = vmul.f32 %v872, %v883
      %v911 = vmul.f32 %v873, %v883
      %v912 = vmul.f32 %v875, %v883
      %v913 = vmul.f32 %v876, %v883
      %v914 = vmul.f32 %v878, %v883
      %v915 = vmul.f32 %v879, %v883
      %v916 = vadd.f32 %v800, %v884
      %v917 = vadd.f32 %v801, %v885
      %v918 = vadd.f32 %v802, %v886
      %v919 = vadd.f32 %v803, %v887
      %v920 = vadd.f32 %v804, %v888
      %v921 = vadd.f32 %v805, %v889
      %v922 = vadd.f32 %v806, %v890
      %v923 = vadd.f32 %v807, %v891
      %v924 = vadd.f32 %v808, %v892
      %v925 = vadd.f32 %v809, %v893
      %v926 = vadd.f32 %v810, %v894
      %v927 = vadd.f32 %v811, %v895
      %v928 = vadd.f32 %v812, %v896
      %v929 = vadd.f32 %v813, %v897
      %v930 = vadd.f32 %v814, %v898
      %v931 = vadd.f32 %v815, %v899
      %v932 = vadd.f32 %v816, %v900
      %v933 = vadd.f32 %v817, %v901
      %v934 = vadd.f32 %v818, %v902
      %v935 = vadd.f32 %v819, %v903
      %v936 = vadd.f32 %v820, %v904
      %v937 = vadd.f32 %v821, %v905
      %v938 = vadd.f32 %v822, %v906
      %v939 = vadd.f32 %v823, %v907
      %v940 = vadd.f32 %v824, %v908
      %v941 = vadd.f32 %v825, %v909
      %v942 = vadd.f32 %v826, %v910
      %v943 = vadd.f32 %v827, %v911
      %v944 = vadd.f32 %v828, %v912
      %v945 = vadd.f32 %v829, %v913
      %v946 = vadd.f32 %v830, %v914
      %v947 = vadd.f32 %v831, %v915
      %v948 = vld [vmem:[%s881 + $0x1] sm:$0x1]
      %v949 = vperm.slane %v948, 0
      %v950 = vmul.f32 %v833, %v949
      %v951 = vmul.f32 %v834, %v949
      %v952 = vmul.f32 %v835, %v949
      %v953 = vmul.f32 %v836, %v949
      %v954 = vmul.f32 %v837, %v949
      %v955 = vmul.f32 %v838, %v949
      %v956 = vmul.f32 %v839, %v949
      %v957 = vmul.f32 %v840, %v949
      %v958 = vmul.f32 %v841, %v949
      %v959 = vmul.f32 %v842, %v949
      %v960 = vmul.f32 %v843, %v949
      %v961 = vmul.f32 %v844, %v949
      %v962 = vmul.f32 %v845, %v949
      %v963 = vmul.f32 %v846, %v949
      %v964 = vmul.f32 %v847, %v949
      %v965 = vmul.f32 %v848, %v949
      %v966 = vmul.f32 %v849, %v949
      %v967 = vmul.f32 %v850, %v949
      %v968 = vmul.f32 %v851, %v949
      %v969 = vmul.f32 %v852, %v949
      %v970 = vmul.f32 %v853, %v949
      %v971 = vmul.f32 %v854, %v949
      %v972 = vmul.f32 %v855, %v949
      %v973 = vmul.f32 %v856, %v949
      %v974 = vmul.f32 %v857, %v949
      %v975 = vmul.f32 %v858, %v949
      %v976 = vmul.f32 %v859, %v949
      %v977 = vmul.f32 %v860, %v949
      %v978 = vmul.f32 %v861, %v949
      %v979 = vmul.f32 %v862, %v949
      %v980 = vmul.f32 %v863, %v949
      %v981 = vmul.f32 %v864, %v949
      %v982 = vmul.f32 %v865, %v949
      %v983 = vmul.f32 %v866, %v949
      %v984 = vmul.f32 %v867, %v949
      %v985 = vmul.f32 %v868, %v949
      %v986 = vmul.f32 %v869, %v949
      %v987 = vmul.f32 %v870, %v949
      %v988 = vmul.f32 %v871, %v949
      %v989 = vmul.f32 %v872, %v949
      %v990 = vmul.f32 %v873, %v949
      %v991 = vmul.f32 %v874, %v949
      %v992 = vmul.f32 %v875, %v949
      %v993 = vmul.f32 %v876, %v949
      %v994 = vmul.f32 %v877, %v949
      %v995 = vmul.f32 %v878, %v949
      %v996 = vmul.f32 %v879, %v949
      %v997 = vmul.f32 %v880, %v949
      %v1046 = vrot.slane %v950, 1
      %v1047 = vrot.slane %v951, 1
      %v1048 = vsel %vm444, %v1046, %v1047
      %v1049 = vrot.slane %v952, 1
      %v1050 = vsel %vm444, %v1047, %v1049
      %v1051 = vrot.slane %v953, 1
      %v1052 = vrot.slane %v954, 1
      %v1053 = vsel %vm444, %v1051, %v1052
      %v1054 = vrot.slane %v955, 1
      %v1055 = vsel %vm444, %v1052, %v1054
      %v1056 = vrot.slane %v956, 1
      %v1057 = vrot.slane %v957, 1
      %v1058 = vsel %vm444, %v1056, %v1057
      %v1059 = vrot.slane %v958, 1
      %v1060 = vsel %vm444, %v1057, %v1059
      %v1061 = vrot.slane %v959, 1
      %v1062 = vrot.slane %v960, 1
      %v1063 = vsel %vm444, %v1061, %v1062
      %v1064 = vrot.slane %v961, 1
      %v1065 = vsel %vm444, %v1062, %v1064
      %v1066 = vrot.slane %v962, 1
      %v1067 = vrot.slane %v963, 1
      %v1068 = vsel %vm444, %v1066, %v1067
      %v1069 = vrot.slane %v964, 1
      %v1070 = vsel %vm444, %v1067, %v1069
      %v1071 = vrot.slane %v965, 1
      %v1072 = vrot.slane %v966, 1
      %v1073 = vsel %vm444, %v1071, %v1072
      %v1074 = vrot.slane %v967, 1
      %v1075 = vsel %vm444, %v1072, %v1074
      %v1076 = vrot.slane %v968, 1
      %v1077 = vrot.slane %v969, 1
      %v1078 = vsel %vm444, %v1076, %v1077
      %v1079 = vrot.slane %v970, 1
      %v1080 = vsel %vm444, %v1077, %v1079
      %v1081 = vrot.slane %v971, 1
      %v1082 = vrot.slane %v972, 1
      %v1083 = vsel %vm444, %v1081, %v1082
      %v1084 = vrot.slane %v973, 1
      %v1085 = vsel %vm444, %v1082, %v1084
      %v1086 = vrot.slane %v974, 1
      %v1087 = vrot.slane %v975, 1
      %v1088 = vsel %vm444, %v1086, %v1087
      %v1089 = vrot.slane %v976, 1
      %v1090 = vsel %vm444, %v1087, %v1089
      %v1091 = vrot.slane %v977, 1
      %v1092 = vrot.slane %v978, 1
      %v1093 = vsel %vm444, %v1091, %v1092
      %v1094 = vrot.slane %v979, 1
      %v1095 = vsel %vm444, %v1092, %v1094
      %v1096 = vrot.slane %v980, 1
      %v1097 = vrot.slane %v981, 1
      %v1098 = vsel %vm444, %v1096, %v1097
      %v1099 = vrot.slane %v982, 1
      %v1100 = vsel %vm444, %v1097, %v1099
      %v1101 = vrot.slane %v983, 1
      %v1102 = vrot.slane %v984, 1
      %v1103 = vsel %vm444, %v1101, %v1102
      %v1104 = vrot.slane %v985, 1
      %v1105 = vsel %vm444, %v1102, %v1104
      %v1106 = vrot.slane %v986, 1
      %v1107 = vrot.slane %v987, 1
      %v1108 = vsel %vm444, %v1106, %v1107
      %v1109 = vrot.slane %v988, 1
      %v1110 = vsel %vm444, %v1107, %v1109
      %v1111 = vrot.slane %v989, 1
      %v1112 = vrot.slane %v990, 1
      %v1113 = vsel %vm444, %v1111, %v1112
      %v1114 = vrot.slane %v991, 1
      %v1115 = vsel %vm444, %v1112, %v1114
      %v1116 = vrot.slane %v992, 1
      %v1117 = vrot.slane %v993, 1
      %v1118 = vsel %vm444, %v1116, %v1117
      %v1119 = vrot.slane %v994, 1
      %v1120 = vsel %vm444, %v1117, %v1119
      %v1121 = vrot.slane %v995, 1
      %v1122 = vrot.slane %v996, 1
      %v1123 = vsel %vm444, %v1121, %v1122
      %v1124 = vrot.slane %v997, 1
      %v1125 = vsel %vm444, %v1122, %v1124
      %v1158 = vadd.f32 %v916, %v1048
      %v1159 = vadd.f32 %v917, %v1050
      %v1160 = vadd.f32 %v918, %v1053
      %v1161 = vadd.f32 %v919, %v1055
      %v1162 = vadd.f32 %v920, %v1058
      %v1163 = vadd.f32 %v921, %v1060
      %v1164 = vadd.f32 %v922, %v1063
      %v1165 = vadd.f32 %v923, %v1065
      %v1166 = vadd.f32 %v924, %v1068
      %v1167 = vadd.f32 %v925, %v1070
      %v1168 = vadd.f32 %v926, %v1073
      %v1169 = vadd.f32 %v927, %v1075
      %v1170 = vadd.f32 %v928, %v1078
      %v1171 = vadd.f32 %v929, %v1080
      %v1172 = vadd.f32 %v930, %v1083
      %v1173 = vadd.f32 %v931, %v1085
      %v1174 = vadd.f32 %v932, %v1088
      %v1175 = vadd.f32 %v933, %v1090
      %v1176 = vadd.f32 %v934, %v1093
      %v1177 = vadd.f32 %v935, %v1095
      %v1178 = vadd.f32 %v936, %v1098
      %v1179 = vadd.f32 %v937, %v1100
      %v1180 = vadd.f32 %v938, %v1103
      %v1181 = vadd.f32 %v939, %v1105
      %v1182 = vadd.f32 %v940, %v1108
      %v1183 = vadd.f32 %v941, %v1110
      %v1184 = vadd.f32 %v942, %v1113
      %v1185 = vadd.f32 %v943, %v1115
      %v1186 = vadd.f32 %v944, %v1118
      %v1187 = vadd.f32 %v945, %v1120
      %v1188 = vadd.f32 %v946, %v1123
      %v1189 = vadd.f32 %v947, %v1125
      %v1190 = vld [vmem:[%s881 + $0x2] sm:$0x1]
      %v1191 = vperm.slane %v1190, 0
      %v1192 = vmul.f32 %v833, %v1191
      %v1193 = vmul.f32 %v834, %v1191
      %v1194 = vmul.f32 %v835, %v1191
      %v1195 = vmul.f32 %v836, %v1191
      %v1196 = vmul.f32 %v837, %v1191
      %v1197 = vmul.f32 %v838, %v1191
      %v1198 = vmul.f32 %v839, %v1191
      %v1199 = vmul.f32 %v840, %v1191
      %v1200 = vmul.f32 %v841, %v1191
      %v1201 = vmul.f32 %v842, %v1191
      %v1202 = vmul.f32 %v843, %v1191
      %v1203 = vmul.f32 %v844, %v1191
      %v1204 = vmul.f32 %v845, %v1191
      %v1205 = vmul.f32 %v846, %v1191
      %v1206 = vmul.f32 %v847, %v1191
      %v1207 = vmul.f32 %v848, %v1191
      %v1208 = vmul.f32 %v849, %v1191
      %v1209 = vmul.f32 %v850, %v1191
      %v1210 = vmul.f32 %v851, %v1191
      %v1211 = vmul.f32 %v852, %v1191
      %v1212 = vmul.f32 %v853, %v1191
      %v1213 = vmul.f32 %v854, %v1191
      %v1214 = vmul.f32 %v855, %v1191
      %v1215 = vmul.f32 %v856, %v1191
      %v1216 = vmul.f32 %v857, %v1191
      %v1217 = vmul.f32 %v858, %v1191
      %v1218 = vmul.f32 %v859, %v1191
      %v1219 = vmul.f32 %v860, %v1191
      %v1220 = vmul.f32 %v861, %v1191
      %v1221 = vmul.f32 %v862, %v1191
      %v1222 = vmul.f32 %v863, %v1191
      %v1223 = vmul.f32 %v864, %v1191
      %v1224 = vmul.f32 %v865, %v1191
      %v1225 = vmul.f32 %v866, %v1191
      %v1226 = vmul.f32 %v867, %v1191
      %v1227 = vmul.f32 %v868, %v1191
      %v1228 = vmul.f32 %v869, %v1191
      %v1229 = vmul.f32 %v870, %v1191
      %v1230 = vmul.f32 %v871, %v1191
      %v1231 = vmul.f32 %v872, %v1191
      %v1232 = vmul.f32 %v873, %v1191
      %v1233 = vmul.f32 %v874, %v1191
      %v1234 = vmul.f32 %v875, %v1191
      %v1235 = vmul.f32 %v876, %v1191
      %v1236 = vmul.f32 %v877, %v1191
      %v1237 = vmul.f32 %v878, %v1191
      %v1238 = vmul.f32 %v879, %v1191
      %v1239 = vmul.f32 %v880, %v1191
      %v1288 = vrot.slane %v1192, 2
      %v1289 = vrot.slane %v1193, 2
      %v1290 = vsel %vm687, %v1288, %v1289
      %v1291 = vrot.slane %v1194, 2
      %v1292 = vsel %vm687, %v1289, %v1291
      %v1293 = vrot.slane %v1195, 2
      %v1294 = vrot.slane %v1196, 2
      %v1295 = vsel %vm687, %v1293, %v1294
      %v1296 = vrot.slane %v1197, 2
      %v1297 = vsel %vm687, %v1294, %v1296
      %v1298 = vrot.slane %v1198, 2
      %v1299 = vrot.slane %v1199, 2
      %v1300 = vsel %vm687, %v1298, %v1299
      %v1301 = vrot.slane %v1200, 2
      %v1302 = vsel %vm687, %v1299, %v1301
      %v1303 = vrot.slane %v1201, 2
      %v1304 = vrot.slane %v1202, 2
      %v1305 = vsel %vm687, %v1303, %v1304
      %v1306 = vrot.slane %v1203, 2
      %v1307 = vsel %vm687, %v1304, %v1306
      %v1308 = vrot.slane %v1204, 2
      %v1309 = vrot.slane %v1205, 2
      %v1310 = vsel %vm687, %v1308, %v1309
      %v1311 = vrot.slane %v1206, 2
      %v1312 = vsel %vm687, %v1309, %v1311
      %v1313 = vrot.slane %v1207, 2
      %v1314 = vrot.slane %v1208, 2
      %v1315 = vsel %vm687, %v1313, %v1314
      %v1316 = vrot.slane %v1209, 2
      %v1317 = vsel %vm687, %v1314, %v1316
      %v1318 = vrot.slane %v1210, 2
      %v1319 = vrot.slane %v1211, 2
      %v1320 = vsel %vm687, %v1318, %v1319
      %v1321 = vrot.slane %v1212, 2
      %v1322 = vsel %vm687, %v1319, %v1321
      %v1323 = vrot.slane %v1213, 2
      %v1324 = vrot.slane %v1214, 2
      %v1325 = vsel %vm687, %v1323, %v1324
      %v1326 = vrot.slane %v1215, 2
      %v1327 = vsel %vm687, %v1324, %v1326
      %v1328 = vrot.slane %v1216, 2
      %v1329 = vrot.slane %v1217, 2
      %v1330 = vsel %vm687, %v1328, %v1329
      %v1331 = vrot.slane %v1218, 2
      %v1332 = vsel %vm687, %v1329, %v1331
      %v1333 = vrot.slane %v1219, 2
      %v1334 = vrot.slane %v1220, 2
      %v1335 = vsel %vm687, %v1333, %v1334
      %v1336 = vrot.slane %v1221, 2
      %v1337 = vsel %vm687, %v1334, %v1336
      %v1338 = vrot.slane %v1222, 2
      %v1339 = vrot.slane %v1223, 2
      %v1340 = vsel %vm687, %v1338, %v1339
      %v1341 = vrot.slane %v1224, 2
      %v1342 = vsel %vm687, %v1339, %v1341
      %v1343 = vrot.slane %v1225, 2
      %v1344 = vrot.slane %v1226, 2
      %v1345 = vsel %vm687, %v1343, %v1344
      %v1346 = vrot.slane %v1227, 2
      %v1347 = vsel %vm687, %v1344, %v1346
      %v1348 = vrot.slane %v1228, 2
      %v1349 = vrot.slane %v1229, 2
      %v1350 = vsel %vm687, %v1348, %v1349
      %v1351 = vrot.slane %v1230, 2
      %v1352 = vsel %vm687, %v1349, %v1351
      %v1353 = vrot.slane %v1231, 2
      %v1354 = vrot.slane %v1232, 2
      %v1355 = vsel %vm687, %v1353, %v1354
      %v1356 = vrot.slane %v1233, 2
      %v1357 = vsel %vm687, %v1354, %v1356
      %v1358 = vrot.slane %v1234, 2
      %v1359 = vrot.slane %v1235, 2
      %v1360 = vsel %vm687, %v1358, %v1359
      %v1361 = vrot.slane %v1236, 2
      %v1362 = vsel %vm687, %v1359, %v1361
      %v1363 = vrot.slane %v1237, 2
      %v1364 = vrot.slane %v1238, 2
      %v1365 = vsel %vm687, %v1363, %v1364
      %v1366 = vrot.slane %v1239, 2
      %v1367 = vsel %vm687, %v1364, %v1366
      %v1400 = vadd.f32 %v1158, %v1290
      %v1401 = vadd.f32 %v1159, %v1292
      %v1402 = vadd.f32 %v1160, %v1295
      %v1403 = vadd.f32 %v1161, %v1297
      %v1404 = vadd.f32 %v1162, %v1300
      %v1405 = vadd.f32 %v1163, %v1302
      %v1406 = vadd.f32 %v1164, %v1305
      %v1407 = vadd.f32 %v1165, %v1307
      %v1408 = vadd.f32 %v1166, %v1310
      %v1409 = vadd.f32 %v1167, %v1312
      %v1410 = vadd.f32 %v1168, %v1315
      %v1411 = vadd.f32 %v1169, %v1317
      %v1412 = vadd.f32 %v1170, %v1320
      %v1413 = vadd.f32 %v1171, %v1322
      %v1414 = vadd.f32 %v1172, %v1325
      %v1415 = vadd.f32 %v1173, %v1327
      %v1416 = vadd.f32 %v1174, %v1330
      %v1417 = vadd.f32 %v1175, %v1332
      %v1418 = vadd.f32 %v1176, %v1335
      %v1419 = vadd.f32 %v1177, %v1337
      %v1420 = vadd.f32 %v1178, %v1340
      %v1421 = vadd.f32 %v1179, %v1342
      %v1422 = vadd.f32 %v1180, %v1345
      %v1423 = vadd.f32 %v1181, %v1347
      %v1424 = vadd.f32 %v1182, %v1350
      %v1425 = vadd.f32 %v1183, %v1352
      %v1426 = vadd.f32 %v1184, %v1355
      %v1427 = vadd.f32 %v1185, %v1357
      %v1428 = vadd.f32 %v1186, %v1360
      %v1429 = vadd.f32 %v1187, %v1362
      %v1430 = vadd.f32 %v1188, %v1365
      %v1431 = vadd.f32 %v1189, %v1367
      %s1432 = scalar_lea.vmem %s252, 48
      %v1433 = vld [vmem:[%s1432] sm:$0xff]
      %v1434 = vld [vmem:[%s1432 + $0x8] sm:$0xff]
      %v1435 = vld [vmem:[%s1432 + $0x10] sm:$0x3]
      %v1436 = vld [vmem:[%s1432 + $0x18] sm:$0xff]
      %v1437 = vld [vmem:[%s1432 + $0x20] sm:$0xff]
      %v1438 = vld [vmem:[%s1432 + $0x28] sm:$0x3]
      %v1439 = vld [vmem:[%s1432 + $0x30] sm:$0xff]
      %v1440 = vld [vmem:[%s1432 + $0x38] sm:$0xff]
      %v1441 = vld [vmem:[%s1432 + $0x40] sm:$0x3]
      %v1442 = vld [vmem:[%s1432 + $0x48] sm:$0xff]
      %v1443 = vld [vmem:[%s1432 + $0x50] sm:$0xff]
      %v1444 = vld [vmem:[%s1432 + $0x58] sm:$0x3]
      %v1445 = vld [vmem:[%s1432 + $0x60] sm:$0xff]
      %v1446 = vld [vmem:[%s1432 + $0x68] sm:$0xff]
      %v1447 = vld [vmem:[%s1432 + $0x70] sm:$0x3]
      %v1448 = vld [vmem:[%s1432 + $0x78] sm:$0xff]
      %v1449 = vld [vmem:[%s1432 + $0x80] sm:$0xff]
      %v1450 = vld [vmem:[%s1432 + $0x88] sm:$0x3]
      %v1451 = vld [vmem:[%s1432 + $0x90] sm:$0xff]
      %v1452 = vld [vmem:[%s1432 + $0x98] sm:$0xff]
      %v1453 = vld [vmem:[%s1432 + $0xa0] sm:$0x3]
      %v1454 = vld [vmem:[%s1432 + $0xa8] sm:$0xff]
      %v1455 = vld [vmem:[%s1432 + $0xb0] sm:$0xff]
      %v1456 = vld [vmem:[%s1432 + $0xb8] sm:$0x3]
      %v1457 = vld [vmem:[%s1432 + $0xc0] sm:$0xff]
      %v1458 = vld [vmem:[%s1432 + $0xc8] sm:$0xff]
      %v1459 = vld [vmem:[%s1432 + $0xd0] sm:$0x3]
      %v1460 = vld [vmem:[%s1432 + $0xd8] sm:$0xff]
      %v1461 = vld [vmem:[%s1432 + $0xe0] sm:$0xff]
      %v1462 = vld [vmem:[%s1432 + $0xe8] sm:$0x3]
      %v1463 = vld [vmem:[%s1432 + $0xf0] sm:$0xff]
      %v1464 = vld [vmem:[%s1432 + $0xf8] sm:$0xff]
      %v1465 = vld [vmem:[%s1432 + $0x100] sm:$0x3]
      %v1466 = vld [vmem:[%s1432 + $0x108] sm:$0xff]
      %v1467 = vld [vmem:[%s1432 + $0x110] sm:$0xff]
      %v1468 = vld [vmem:[%s1432 + $0x118] sm:$0x3]
      %v1469 = vld [vmem:[%s1432 + $0x120] sm:$0xff]
      %v1470 = vld [vmem:[%s1432 + $0x128] sm:$0xff]
      %v1471 = vld [vmem:[%s1432 + $0x130] sm:$0x3]
      %v1472 = vld [vmem:[%s1432 + $0x138] sm:$0xff]
      %v1473 = vld [vmem:[%s1432 + $0x140] sm:$0xff]
      %v1474 = vld [vmem:[%s1432 + $0x148] sm:$0x3]
      %v1475 = vld [vmem:[%s1432 + $0x150] sm:$0xff]
      %v1476 = vld [vmem:[%s1432 + $0x158] sm:$0xff]
      %v1477 = vld [vmem:[%s1432 + $0x160] sm:$0x3]
      %v1478 = vld [vmem:[%s1432 + $0x168] sm:$0xff]
      %v1479 = vld [vmem:[%s1432 + $0x170] sm:$0xff]
      %v1480 = vld [vmem:[%s1432 + $0x178] sm:$0x3]
      %s1481 = scalar_lea.vmem %s1, 8
      %v1482 = vld [vmem:[%s1481] sm:$0x1]
      %v1483 = vperm.slane %v1482, 0
      %v1484 = vmul.f32 %v1433, %v1483
      %v1485 = vmul.f32 %v1434, %v1483
      %v1486 = vmul.f32 %v1436, %v1483
      %v1487 = vmul.f32 %v1437, %v1483
      %v1488 = vmul.f32 %v1439, %v1483
      %v1489 = vmul.f32 %v1440, %v1483
      %v1490 = vmul.f32 %v1442, %v1483
      %v1491 = vmul.f32 %v1443, %v1483
      %v1492 = vmul.f32 %v1445, %v1483
      %v1493 = vmul.f32 %v1446, %v1483
      %v1494 = vmul.f32 %v1448, %v1483
      %v1495 = vmul.f32 %v1449, %v1483
      %v1496 = vmul.f32 %v1451, %v1483
      %v1497 = vmul.f32 %v1452, %v1483
      %v1498 = vmul.f32 %v1454, %v1483
      %v1499 = vmul.f32 %v1455, %v1483
      %v1500 = vmul.f32 %v1457, %v1483
      %v1501 = vmul.f32 %v1458, %v1483
      %v1502 = vmul.f32 %v1460, %v1483
      %v1503 = vmul.f32 %v1461, %v1483
      %v1504 = vmul.f32 %v1463, %v1483
      %v1505 = vmul.f32 %v1464, %v1483
      %v1506 = vmul.f32 %v1466, %v1483
      %v1507 = vmul.f32 %v1467, %v1483
      %v1508 = vmul.f32 %v1469, %v1483
      %v1509 = vmul.f32 %v1470, %v1483
      %v1510 = vmul.f32 %v1472, %v1483
      %v1511 = vmul.f32 %v1473, %v1483
      %v1512 = vmul.f32 %v1475, %v1483
      %v1513 = vmul.f32 %v1476, %v1483
      %v1514 = vmul.f32 %v1478, %v1483
      %v1515 = vmul.f32 %v1479, %v1483
      %v1516 = vadd.f32 %v1400, %v1484
      %v1517 = vadd.f32 %v1401, %v1485
      %v1518 = vadd.f32 %v1402, %v1486
      %v1519 = vadd.f32 %v1403, %v1487
      %v1520 = vadd.f32 %v1404, %v1488
      %v1521 = vadd.f32 %v1405, %v1489
      %v1522 = vadd.f32 %v1406, %v1490
      %v1523 = vadd.f32 %v1407, %v1491
      %v1524 = vadd.f32 %v1408, %v1492
      %v1525 = vadd.f32 %v1409, %v1493
      %v1526 = vadd.f32 %v1410, %v1494
      %v1527 = vadd.f32 %v1411, %v1495
      %v1528 = vadd.f32 %v1412, %v1496
      %v1529 = vadd.f32 %v1413, %v1497
      %v1530 = vadd.f32 %v1414, %v1498
      %v1531 = vadd.f32 %v1415, %v1499
      %v1532 = vadd.f32 %v1416, %v1500
      %v1533 = vadd.f32 %v1417, %v1501
      %v1534 = vadd.f32 %v1418, %v1502
      %v1535 = vadd.f32 %v1419, %v1503
      %v1536 = vadd.f32 %v1420, %v1504
      %v1537 = vadd.f32 %v1421, %v1505
      %v1538 = vadd.f32 %v1422, %v1506
      %v1539 = vadd.f32 %v1423, %v1507
      %v1540 = vadd.f32 %v1424, %v1508
      %v1541 = vadd.f32 %v1425, %v1509
      %v1542 = vadd.f32 %v1426, %v1510
      %v1543 = vadd.f32 %v1427, %v1511
      %v1544 = vadd.f32 %v1428, %v1512
      %v1545 = vadd.f32 %v1429, %v1513
      %v1546 = vadd.f32 %v1430, %v1514
      %v1547 = vadd.f32 %v1431, %v1515
      %v1548 = vld [vmem:[%s1481 + $0x1] sm:$0x1]
      %v1549 = vperm.slane %v1548, 0
      %v1550 = vmul.f32 %v1433, %v1549
      %v1551 = vmul.f32 %v1434, %v1549
      %v1552 = vmul.f32 %v1435, %v1549
      %v1553 = vmul.f32 %v1436, %v1549
      %v1554 = vmul.f32 %v1437, %v1549
      %v1555 = vmul.f32 %v1438, %v1549
      %v1556 = vmul.f32 %v1439, %v1549
      %v1557 = vmul.f32 %v1440, %v1549
      %v1558 = vmul.f32 %v1441, %v1549
      %v1559 = vmul.f32 %v1442, %v1549
      %v1560 = vmul.f32 %v1443, %v1549
      %v1561 = vmul.f32 %v1444, %v1549
      %v1562 = vmul.f32 %v1445, %v1549
      %v1563 = vmul.f32 %v1446, %v1549
      %v1564 = vmul.f32 %v1447, %v1549
      %v1565 = vmul.f32 %v1448, %v1549
      %v1566 = vmul.f32 %v1449, %v1549
      %v1567 = vmul.f32 %v1450, %v1549
      %v1568 = vmul.f32 %v1451, %v1549
      %v1569 = vmul.f32 %v1452, %v1549
      %v1570 = vmul.f32 %v1453, %v1549
      %v1571 = vmul.f32 %v1454, %v1549
      %v1572 = vmul.f32 %v1455, %v1549
      %v1573 = vmul.f32 %v1456, %v1549
      %v1574 = vmul.f32 %v1457, %v1549
      %v1575 = vmul.f32 %v1458, %v1549
      %v1576 = vmul.f32 %v1459, %v1549
      %v1577 = vmul.f32 %v1460, %v1549
      %v1578 = vmul.f32 %v1461, %v1549
      %v1579 = vmul.f32 %v1462, %v1549
      %v1580 = vmul.f32 %v1463, %v1549
      %v1581 = vmul.f32 %v1464, %v1549
      %v1582 = vmul.f32 %v1465, %v1549
      %v1583 = vmul.f32 %v1466, %v1549
      %v1584 = vmul.f32 %v1467, %v1549
      %v1585 = vmul.f32 %v1468, %v1549
      %v1586 = vmul.f32 %v1469, %v1549
      %v1587 = vmul.f32 %v1470, %v1549
      %v1588 = vmul.f32 %v1471, %v1549
      %v1589 = vmul.f32 %v1472, %v1549
      %v1590 = vmul.f32 %v1473, %v1549
      %v1591 = vmul.f32 %v1474, %v1549
      %v1592 = vmul.f32 %v1475, %v1549
      %v1593 = vmul.f32 %v1476, %v1549
      %v1594 = vmul.f32 %v1477, %v1549
      %v1595 = vmul.f32 %v1478, %v1549
      %v1596 = vmul.f32 %v1479, %v1549
      %v1597 = vmul.f32 %v1480, %v1549
      %v1646 = vrot.slane %v1550, 1
      %v1647 = vrot.slane %v1551, 1
      %v1648 = vsel %vm444, %v1646, %v1647
      %v1649 = vrot.slane %v1552, 1
      %v1650 = vsel %vm444, %v1647, %v1649
      %v1651 = vrot.slane %v1553, 1
      %v1652 = vrot.slane %v1554, 1
      %v1653 = vsel %vm444, %v1651, %v1652
      %v1654 = vrot.slane %v1555, 1
      %v1655 = vsel %vm444, %v1652, %v1654
      %v1656 = vrot.slane %v1556, 1
      %v1657 = vrot.slane %v1557, 1
      %v1658 = vsel %vm444, %v1656, %v1657
      %v1659 = vrot.slane %v1558, 1
      %v1660 = vsel %vm444, %v1657, %v1659
      %v1661 = vrot.slane %v1559, 1
      %v1662 = vrot.slane %v1560, 1
      %v1663 = vsel %vm444, %v1661, %v1662
      %v1664 = vrot.slane %v1561, 1
      %v1665 = vsel %vm444, %v1662, %v1664
      %v1666 = vrot.slane %v1562, 1
      %v1667 = vrot.slane %v1563, 1
      %v1668 = vsel %vm444, %v1666, %v1667
      %v1669 = vrot.slane %v1564, 1
      %v1670 = vsel %vm444, %v1667, %v1669
      %v1671 = vrot.slane %v1565, 1
      %v1672 = vrot.slane %v1566, 1
      %v1673 = vsel %vm444, %v1671, %v1672
      %v1674 = vrot.slane %v1567, 1
      %v1675 = vsel %vm444, %v1672, %v1674
      %v1676 = vrot.slane %v1568, 1
      %v1677 = vrot.slane %v1569, 1
      %v1678 = vsel %vm444, %v1676, %v1677
      %v1679 = vrot.slane %v1570, 1
      %v1680 = vsel %vm444, %v1677, %v1679
      %v1681 = vrot.slane %v1571, 1
      %v1682 = vrot.slane %v1572, 1
      %v1683 = vsel %vm444, %v1681, %v1682
      %v1684 = vrot.slane %v1573, 1
      %v1685 = vsel %vm444, %v1682, %v1684
      %v1686 = vrot.slane %v1574, 1
      %v1687 = vrot.slane %v1575, 1
      %v1688 = vsel %vm444, %v1686, %v1687
      %v1689 = vrot.slane %v1576, 1
      %v1690 = vsel %vm444, %v1687, %v1689
      %v1691 = vrot.slane %v1577, 1
      %v1692 = vrot.slane %v1578, 1
      %v1693 = vsel %vm444, %v1691, %v1692
      %v1694 = vrot.slane %v1579, 1
      %v1695 = vsel %vm444, %v1692, %v1694
      %v1696 = vrot.slane %v1580, 1
      %v1697 = vrot.slane %v1581, 1
      %v1698 = vsel %vm444, %v1696, %v1697
      %v1699 = vrot.slane %v1582, 1
      %v1700 = vsel %vm444, %v1697, %v1699
      %v1701 = vrot.slane %v1583, 1
      %v1702 = vrot.slane %v1584, 1
      %v1703 = vsel %vm444, %v1701, %v1702
      %v1704 = vrot.slane %v1585, 1
      %v1705 = vsel %vm444, %v1702, %v1704
      %v1706 = vrot.slane %v1586, 1
      %v1707 = vrot.slane %v1587, 1
      %v1708 = vsel %vm444, %v1706, %v1707
      %v1709 = vrot.slane %v1588, 1
      %v1710 = vsel %vm444, %v1707, %v1709
      %v1711 = vrot.slane %v1589, 1
      %v1712 = vrot.slane %v1590, 1
      %v1713 = vsel %vm444, %v1711, %v1712
      %v1714 = vrot.slane %v1591, 1
      %v1715 = vsel %vm444, %v1712, %v1714
      %v1716 = vrot.slane %v1592, 1
      %v1717 = vrot.slane %v1593, 1
      %v1718 = vsel %vm444, %v1716, %v1717
      %v1719 = vrot.slane %v1594, 1
      %v1720 = vsel %vm444, %v1717, %v1719
      %v1721 = vrot.slane %v1595, 1
      %v1722 = vrot.slane %v1596, 1
      %v1723 = vsel %vm444, %v1721, %v1722
      %v1724 = vrot.slane %v1597, 1
      %v1725 = vsel %vm444, %v1722, %v1724
      %v1758 = vadd.f32 %v1516, %v1648
      %v1759 = vadd.f32 %v1517, %v1650
      %v1760 = vadd.f32 %v1518, %v1653
      %v1761 = vadd.f32 %v1519, %v1655
      %v1762 = vadd.f32 %v1520, %v1658
      %v1763 = vadd.f32 %v1521, %v1660
      %v1764 = vadd.f32 %v1522, %v1663
      %v1765 = vadd.f32 %v1523, %v1665
      %v1766 = vadd.f32 %v1524, %v1668
      %v1767 = vadd.f32 %v1525, %v1670
      %v1768 = vadd.f32 %v1526, %v1673
      %v1769 = vadd.f32 %v1527, %v1675
      %v1770 = vadd.f32 %v1528, %v1678
      %v1771 = vadd.f32 %v1529, %v1680
      %v1772 = vadd.f32 %v1530, %v1683
      %v1773 = vadd.f32 %v1531, %v1685
      %v1774 = vadd.f32 %v1532, %v1688
      %v1775 = vadd.f32 %v1533, %v1690
      %v1776 = vadd.f32 %v1534, %v1693
      %v1777 = vadd.f32 %v1535, %v1695
      %v1778 = vadd.f32 %v1536, %v1698
      %v1779 = vadd.f32 %v1537, %v1700
      %v1780 = vadd.f32 %v1538, %v1703
      %v1781 = vadd.f32 %v1539, %v1705
      %v1782 = vadd.f32 %v1540, %v1708
      %v1783 = vadd.f32 %v1541, %v1710
      %v1784 = vadd.f32 %v1542, %v1713
      %v1785 = vadd.f32 %v1543, %v1715
      %v1786 = vadd.f32 %v1544, %v1718
      %v1787 = vadd.f32 %v1545, %v1720
      %v1788 = vadd.f32 %v1546, %v1723
      %v1789 = vadd.f32 %v1547, %v1725
      %v1790 = vld [vmem:[%s1481 + $0x2] sm:$0x1]
      %v1791 = vperm.slane %v1790, 0
      %v1792 = vmul.f32 %v1433, %v1791
      %v1793 = vmul.f32 %v1434, %v1791
      %v1794 = vmul.f32 %v1435, %v1791
      %v1795 = vmul.f32 %v1436, %v1791
      %v1796 = vmul.f32 %v1437, %v1791
      %v1797 = vmul.f32 %v1438, %v1791
      %v1798 = vmul.f32 %v1439, %v1791
      %v1799 = vmul.f32 %v1440, %v1791
      %v1800 = vmul.f32 %v1441, %v1791
      %v1801 = vmul.f32 %v1442, %v1791
      %v1802 = vmul.f32 %v1443, %v1791
      %v1803 = vmul.f32 %v1444, %v1791
      %v1804 = vmul.f32 %v1445, %v1791
      %v1805 = vmul.f32 %v1446, %v1791
      %v1806 = vmul.f32 %v1447, %v1791
      %v1807 = vmul.f32 %v1448, %v1791
      %v1808 = vmul.f32 %v1449, %v1791
      %v1809 = vmul.f32 %v1450, %v1791
      %v1810 = vmul.f32 %v1451, %v1791
      %v1811 = vmul.f32 %v1452, %v1791
      %v1812 = vmul.f32 %v1453, %v1791
      %v1813 = vmul.f32 %v1454, %v1791
      %v1814 = vmul.f32 %v1455, %v1791
      %v1815 = vmul.f32 %v1456, %v1791
      %v1816 = vmul.f32 %v1457, %v1791
      %v1817 = vmul.f32 %v1458, %v1791
      %v1818 = vmul.f32 %v1459, %v1791
      %v1819 = vmul.f32 %v1460, %v1791
      %v1820 = vmul.f32 %v1461, %v1791
      %v1821 = vmul.f32 %v1462, %v1791
      %v1822 = vmul.f32 %v1463, %v1791
      %v1823 = vmul.f32 %v1464, %v1791
      %v1824 = vmul.f32 %v1465, %v1791
      %v1825 = vmul.f32 %v1466, %v1791
      %v1826 = vmul.f32 %v1467, %v1791
      %v1827 = vmul.f32 %v1468, %v1791
      %v1828 = vmul.f32 %v1469, %v1791
      %v1829 = vmul.f32 %v1470, %v1791
      %v1830 = vmul.f32 %v1471, %v1791
      %v1831 = vmul.f32 %v1472, %v1791
      %v1832 = vmul.f32 %v1473, %v1791
      %v1833 = vmul.f32 %v1474, %v1791
      %v1834 = vmul.f32 %v1475, %v1791
      %v1835 = vmul.f32 %v1476, %v1791
      %v1836 = vmul.f32 %v1477, %v1791
      %v1837 = vmul.f32 %v1478, %v1791
      %v1838 = vmul.f32 %v1479, %v1791
      %v1839 = vmul.f32 %v1480, %v1791
      %v1888 = vrot.slane %v1792, 2
      %v1889 = vrot.slane %v1793, 2
      %v1890 = vsel %vm687, %v1888, %v1889
      %v1891 = vrot.slane %v1794, 2
      %v1892 = vsel %vm687, %v1889, %v1891
      %v1893 = vrot.slane %v1795, 2
      %v1894 = vrot.slane %v1796, 2
      %v1895 = vsel %vm687, %v1893, %v1894
      %v1896 = vrot.slane %v1797, 2
      %v1897 = vsel %vm687, %v1894, %v1896
      %v1898 = vrot.slane %v1798, 2
      %v1899 = vrot.slane %v1799, 2
      %v1900 = vsel %vm687, %v1898, %v1899
      %v1901 = vrot.slane %v1800, 2
      %v1902 = vsel %vm687, %v1899, %v1901
      %v1903 = vrot.slane %v1801, 2
      %v1904 = vrot.slane %v1802, 2
      %v1905 = vsel %vm687, %v1903, %v1904
      %v1906 = vrot.slane %v1803, 2
      %v1907 = vsel %vm687, %v1904, %v1906
      %v1908 = vrot.slane %v1804, 2
      %v1909 = vrot.slane %v1805, 2
      %v1910 = vsel %vm687, %v1908, %v1909
      %v1911 = vrot.slane %v1806, 2
      %v1912 = vsel %vm687, %v1909, %v1911
      %v1913 = vrot.slane %v1807, 2
      %v1914 = vrot.slane %v1808, 2
      %v1915 = vsel %vm687, %v1913, %v1914
      %v1916 = vrot.slane %v1809, 2
      %v1917 = vsel %vm687, %v1914, %v1916
      %v1918 = vrot.slane %v1810, 2
      %v1919 = vrot.slane %v1811, 2
      %v1920 = vsel %vm687, %v1918, %v1919
      %v1921 = vrot.slane %v1812, 2
      %v1922 = vsel %vm687, %v1919, %v1921
      %v1923 = vrot.slane %v1813, 2
      %v1924 = vrot.slane %v1814, 2
      %v1925 = vsel %vm687, %v1923, %v1924
      %v1926 = vrot.slane %v1815, 2
      %v1927 = vsel %vm687, %v1924, %v1926
      %v1928 = vrot.slane %v1816, 2
      %v1929 = vrot.slane %v1817, 2
      %v1930 = vsel %vm687, %v1928, %v1929
      %v1931 = vrot.slane %v1818, 2
      %v1932 = vsel %vm687, %v1929, %v1931
      %v1933 = vrot.slane %v1819, 2
      %v1934 = vrot.slane %v1820, 2
      %v1935 = vsel %vm687, %v1933, %v1934
      %v1936 = vrot.slane %v1821, 2
      %v1937 = vsel %vm687, %v1934, %v1936
      %v1938 = vrot.slane %v1822, 2
      %v1939 = vrot.slane %v1823, 2
      %v1940 = vsel %vm687, %v1938, %v1939
      %v1941 = vrot.slane %v1824, 2
      %v1942 = vsel %vm687, %v1939, %v1941
      %v1943 = vrot.slane %v1825, 2
      %v1944 = vrot.slane %v1826, 2
      %v1945 = vsel %vm687, %v1943, %v1944
      %v1946 = vrot.slane %v1827, 2
      %v1947 = vsel %vm687, %v1944, %v1946
      %v1948 = vrot.slane %v1828, 2
      %v1949 = vrot.slane %v1829, 2
      %v1950 = vsel %vm687, %v1948, %v1949
      %v1951 = vrot.slane %v1830, 2
      %v1952 = vsel %vm687, %v1949, %v1951
      %v1953 = vrot.slane %v1831, 2
      %v1954 = vrot.slane %v1832, 2
      %v1955 = vsel %vm687, %v1953, %v1954
      %v1956 = vrot.slane %v1833, 2
      %v1957 = vsel %vm687, %v1954, %v1956
      %v1958 = vrot.slane %v1834, 2
      %v1959 = vrot.slane %v1835, 2
      %v1960 = vsel %vm687, %v1958, %v1959
      %v1961 = vrot.slane %v1836, 2
      %v1962 = vsel %vm687, %v1959, %v1961
      %v1963 = vrot.slane %v1837, 2
      %v1964 = vrot.slane %v1838, 2
      %v1965 = vsel %vm687, %v1963, %v1964
      %v1966 = vrot.slane %v1839, 2
      %v1967 = vsel %vm687, %v1964, %v1966
      %v2000 = vadd.f32 %v1758, %v1890
      %v2001 = vadd.f32 %v1759, %v1892
      %v2002 = vadd.f32 %v1760, %v1895
      %v2003 = vadd.f32 %v1761, %v1897
      %v2004 = vadd.f32 %v1762, %v1900
      %v2005 = vadd.f32 %v1763, %v1902
      %v2006 = vadd.f32 %v1764, %v1905
      %v2007 = vadd.f32 %v1765, %v1907
      %v2008 = vadd.f32 %v1766, %v1910
      %v2009 = vadd.f32 %v1767, %v1912
      %v2010 = vadd.f32 %v1768, %v1915
      %v2011 = vadd.f32 %v1769, %v1917
      %v2012 = vadd.f32 %v1770, %v1920
      %v2013 = vadd.f32 %v1771, %v1922
      %v2014 = vadd.f32 %v1772, %v1925
      %v2015 = vadd.f32 %v1773, %v1927
      %v2016 = vadd.f32 %v1774, %v1930
      %v2017 = vadd.f32 %v1775, %v1932
      %v2018 = vadd.f32 %v1776, %v1935
      %v2019 = vadd.f32 %v1777, %v1937
      %v2020 = vadd.f32 %v1778, %v1940
      %v2021 = vadd.f32 %v1779, %v1942
      %v2022 = vadd.f32 %v1780, %v1945
      %v2023 = vadd.f32 %v1781, %v1947
      %v2024 = vadd.f32 %v1782, %v1950
      %v2025 = vadd.f32 %v1783, %v1952
      %v2026 = vadd.f32 %v1784, %v1955
      %v2027 = vadd.f32 %v1785, %v1957
      %v2028 = vadd.f32 %v1786, %v1960
      %v2029 = vadd.f32 %v1787, %v1962
      %v2030 = vadd.f32 %v1788, %v1965
      %v2031 = vadd.f32 %v1789, %v1967
      %v2032 = vld [vmem:[%s2] sm:$0x1]
      %v2034 = vperm.slane %v2032, 0
      %v2036 = vadd.f32 %v2000, %v2034
      %v2037 = vadd.f32 %v2001, %v2034
      %v2038 = vadd.f32 %v2002, %v2034
      %v2039 = vadd.f32 %v2003, %v2034
      %v2040 = vadd.f32 %v2004, %v2034
      %v2041 = vadd.f32 %v2005, %v2034
      %v2042 = vadd.f32 %v2006, %v2034
      %v2043 = vadd.f32 %v2007, %v2034
      %v2044 = vadd.f32 %v2008, %v2034
      %v2045 = vadd.f32 %v2009, %v2034
      %v2046 = vadd.f32 %v2010, %v2034
      %v2047 = vadd.f32 %v2011, %v2034
      %v2048 = vadd.f32 %v2012, %v2034
      %v2049 = vadd.f32 %v2013, %v2034
      %v2050 = vadd.f32 %v2014, %v2034
      %v2051 = vadd.f32 %v2015, %v2034
      %v2052 = vadd.f32 %v2016, %v2034
      %v2053 = vadd.f32 %v2017, %v2034
      %v2054 = vadd.f32 %v2018, %v2034
      %v2055 = vadd.f32 %v2019, %v2034
      %v2056 = vadd.f32 %v2020, %v2034
      %v2057 = vadd.f32 %v2021, %v2034
      %v2058 = vadd.f32 %v2022, %v2034
      %v2059 = vadd.f32 %v2023, %v2034
      %v2060 = vadd.f32 %v2024, %v2034
      %v2061 = vadd.f32 %v2025, %v2034
      %v2062 = vadd.f32 %v2026, %v2034
      %v2063 = vadd.f32 %v2027, %v2034
      %v2064 = vadd.f32 %v2028, %v2034
      %v2065 = vadd.f32 %v2029, %v2034
      %v2066 = vadd.f32 %v2030, %v2034
      %v2067 = vadd.f32 %v2031, %v2034
      %v2068 = vadd.f32 %v2036, 3.0
      %v2069 = vadd.f32 %v2037, 3.0
      %v2070 = vadd.f32 %v2038, 3.0
      %v2071 = vadd.f32 %v2039, 3.0
      %v2072 = vadd.f32 %v2040, 3.0
      %v2073 = vadd.f32 %v2041, 3.0
      %v2074 = vadd.f32 %v2042, 3.0
      %v2075 = vadd.f32 %v2043, 3.0
      %v2076 = vadd.f32 %v2044, 3.0
      %v2077 = vadd.f32 %v2045, 3.0
      %v2078 = vadd.f32 %v2046, 3.0
      %v2079 = vadd.f32 %v2047, 3.0
      %v2080 = vadd.f32 %v2048, 3.0
      %v2081 = vadd.f32 %v2049, 3.0
      %v2082 = vadd.f32 %v2050, 3.0
      %v2083 = vadd.f32 %v2051, 3.0
      %v2084 = vadd.f32 %v2052, 3.0
      %v2085 = vadd.f32 %v2053, 3.0
      %v2086 = vadd.f32 %v2054, 3.0
      %v2087 = vadd.f32 %v2055, 3.0
      %v2088 = vadd.f32 %v2056, 3.0
      %v2089 = vadd.f32 %v2057, 3.0
      %v2090 = vadd.f32 %v2058, 3.0
      %v2091 = vadd.f32 %v2059, 3.0
      %v2092 = vadd.f32 %v2060, 3.0
      %v2093 = vadd.f32 %v2061, 3.0
      %v2094 = vadd.f32 %v2062, 3.0
      %v2095 = vadd.f32 %v2063, 3.0
      %v2096 = vadd.f32 %v2064, 3.0
      %v2097 = vadd.f32 %v2065, 3.0
      %v2098 = vadd.f32 %v2066, 3.0
      %v2099 = vadd.f32 %v2067, 3.0
      %v2100 = vmax.f32 %v2068, 0.0
      %v2101 = vmax.f32 %v2069, 0.0
      %v2102 = vmax.f32 %v2070, 0.0
      %v2103 = vmax.f32 %v2071, 0.0
      %v2104 = vmax.f32 %v2072, 0.0
      %v2105 = vmax.f32 %v2073, 0.0
      %v2106 = vmax.f32 %v2074, 0.0
      %v2107 = vmax.f32 %v2075, 0.0
      %v2108 = vmax.f32 %v2076, 0.0
      %v2109 = vmax.f32 %v2077, 0.0
      %v2110 = vmax.f32 %v2078, 0.0
      %v2111 = vmax.f32 %v2079, 0.0
      %v2112 = vmax.f32 %v2080, 0.0
      %v2113 = vmax.f32 %v2081, 0.0
      %v2114 = vmax.f32 %v2082, 0.0
      %v2115 = vmax.f32 %v2083, 0.0
      %v2116 = vmax.f32 %v2084, 0.0
      %v2117 = vmax.f32 %v2085, 0.0
      %v2118 = vmax.f32 %v2086, 0.0
      %v2119 = vmax.f32 %v2087, 0.0
      %v2120 = vmax.f32 %v2088, 0.0
      %v2121 = vmax.f32 %v2089, 0.0
      %v2122 = vmax.f32 %v2090, 0.0
      %v2123 = vmax.f32 %v2091, 0.0
      %v2124 = vmax.f32 %v2092, 0.0
      %v2125 = vmax.f32 %v2093, 0.0
      %v2126 = vmax.f32 %v2094, 0.0
      %v2127 = vmax.f32 %v2095, 0.0
      %v2128 = vmax.f32 %v2096, 0.0
      %v2129 = vmax.f32 %v2097, 0.0
      %v2130 = vmax.f32 %v2098, 0.0
      %v2131 = vmax.f32 %v2099, 0.0
      %v2132 = vmin.f32 %v2100, 6.0
      %v2133 = vmin.f32 %v2101, 6.0
      %v2134 = vmin.f32 %v2102, 6.0
      %v2135 = vmin.f32 %v2103, 6.0
      %v2136 = vmin.f32 %v2104, 6.0
      %v2137 = vmin.f32 %v2105, 6.0
      %v2138 = vmin.f32 %v2106, 6.0
      %v2139 = vmin.f32 %v2107, 6.0
      %v2140 = vmin.f32 %v2108, 6.0
      %v2141 = vmin.f32 %v2109, 6.0
      %v2142 = vmin.f32 %v2110, 6.0
      %v2143 = vmin.f32 %v2111, 6.0
      %v2144 = vmin.f32 %v2112, 6.0
      %v2145 = vmin.f32 %v2113, 6.0
      %v2146 = vmin.f32 %v2114, 6.0
      %v2147 = vmin.f32 %v2115, 6.0
      %v2148 = vmin.f32 %v2116, 6.0
      %v2149 = vmin.f32 %v2117, 6.0
      %v2150 = vmin.f32 %v2118, 6.0
      %v2151 = vmin.f32 %v2119, 6.0
      %v2152 = vmin.f32 %v2120, 6.0
      %v2153 = vmin.f32 %v2121, 6.0
      %v2154 = vmin.f32 %v2122, 6.0
      %v2155 = vmin.f32 %v2123, 6.0
      %v2156 = vmin.f32 %v2124, 6.0
      %v2157 = vmin.f32 %v2125, 6.0
      %v2158 = vmin.f32 %v2126, 6.0
      %v2159 = vmin.f32 %v2127, 6.0
      %v2160 = vmin.f32 %v2128, 6.0
      %v2161 = vmin.f32 %v2129, 6.0
      %v2162 = vmin.f32 %v2130, 6.0
      %v2163 = vmin.f32 %v2131, 6.0
      %v2164 = vmul.f32 %v2036, %v2132
      %v2165 = vmul.f32 %v2037, %v2133
      %v2166 = vmul.f32 %v2038, %v2134
      %v2167 = vmul.f32 %v2039, %v2135
      %v2168 = vmul.f32 %v2040, %v2136
      %v2169 = vmul.f32 %v2041, %v2137
      %v2170 = vmul.f32 %v2042, %v2138
      %v2171 = vmul.f32 %v2043, %v2139
      %v2172 = vmul.f32 %v2044, %v2140
      %v2173 = vmul.f32 %v2045, %v2141
      %v2174 = vmul.f32 %v2046, %v2142
      %v2175 = vmul.f32 %v2047, %v2143
      %v2176 = vmul.f32 %v2048, %v2144
      %v2177 = vmul.f32 %v2049, %v2145
      %v2178 = vmul.f32 %v2050, %v2146
      %v2179 = vmul.f32 %v2051, %v2147
      %v2180 = vmul.f32 %v2052, %v2148
      %v2181 = vmul.f32 %v2053, %v2149
      %v2182 = vmul.f32 %v2054, %v2150
      %v2183 = vmul.f32 %v2055, %v2151
      %v2184 = vmul.f32 %v2056, %v2152
      %v2185 = vmul.f32 %v2057, %v2153
      %v2186 = vmul.f32 %v2058, %v2154
      %v2187 = vmul.f32 %v2059, %v2155
      %v2188 = vmul.f32 %v2060, %v2156
      %v2189 = vmul.f32 %v2061, %v2157
      %v2190 = vmul.f32 %v2062, %v2158
      %v2191 = vmul.f32 %v2063, %v2159
      %v2192 = vmul.f32 %v2064, %v2160
      %v2193 = vmul.f32 %v2065, %v2161
      %v2194 = vmul.f32 %v2066, %v2162
      %v2195 = vmul.f32 %v2067, %v2163
      %v2196 = vld [vmem:[%s3] sm:$0xff]
      %v2197 = vld [vmem:[%s3 + $0x8] sm:$0xff]
      %v2198 = vld [vmem:[%s3 + $0x10] sm:$0xff]
      %v2199 = vld [vmem:[%s3 + $0x18] sm:$0xff]
      %v2200 = vld [vmem:[%s3 + $0x20] sm:$0xff]
      %v2201 = vld [vmem:[%s3 + $0x28] sm:$0xff]
      %v2202 = vld [vmem:[%s3 + $0x30] sm:$0xff]
      %v2203 = vld [vmem:[%s3 + $0x38] sm:$0xff]
      %v2204 = vld [vmem:[%s3 + $0x40] sm:$0xff]
      %v2205 = vld [vmem:[%s3 + $0x48] sm:$0xff]
      %v2206 = vld [vmem:[%s3 + $0x50] sm:$0xff]
      %v2207 = vld [vmem:[%s3 + $0x58] sm:$0xff]
      %v2208 = vld [vmem:[%s3 + $0x60] sm:$0xff]
      %v2209 = vld [vmem:[%s3 + $0x68] sm:$0xff]
      %v2210 = vld [vmem:[%s3 + $0x70] sm:$0xff]
      %v2211 = vld [vmem:[%s3 + $0x78] sm:$0xff]
      %v2212 = vld [vmem:[%s4] sm:$0x1]
      %v2214 = vperm.slane %v2212, 0
      %2216 = vmatpush.msra.mxu0 %v2211
      %2217 = vmatpush.msra.mxu0 %v2210
      %2218 = vmatpush.msra.mxu0 %v2209
      %2219 = vmatpush.msra.mxu0 %v2208
      %2220 = vmatpush.msra.mxu0 %v2207
      %2221 = vmatpush.msra.mxu0 %v2206
      %2222 = vmatpush.msra.mxu0 %v2205
      %2223 = vmatpush.msra.mxu0 %v2204
      %2224 = vmatpush.msra.mxu0 %v2203
      %2225 = vmatpush.msra.mxu0 %v2202
      %2226 = vmatpush.msra.mxu0 %v2201
      %2227 = vmatpush.msra.mxu0 %v2200
      %2228 = vmatpush.msra.mxu0 %v2199
      %2229 = vmatpush.msra.mxu0 %v2198
      %2230 = vmatpush.msra.mxu0 %v2197
      %2231 = vmatpush.msra.mxu0 %v2196
      %2232 = vmatmul.f32.gmra.mxu0 %v2164
      %v2233 = vpop.f32.mrf.mxu0
      %v2234 = vadd.f32 %v2214, %v2233
      %2235 = vmatmul.f32.gmra.mxu0 %v2165
      %v2236 = vpop.f32.mrf.mxu0
      %v2237 = vadd.f32 %v2214, %v2236
      %2238 = vmatmul.f32.gmra.mxu0 %v2166
      %v2239 = vpop.f32.mrf.mxu0
      %v2240 = vadd.f32 %v2214, %v2239
      %2241 = vmatmul.f32.gmra.mxu0 %v2167
      %v2242 = vpop.f32.mrf.mxu0
      %v2243 = vadd.f32 %v2214, %v2242
      %2244 = vmatmul.f32.gmra.mxu0 %v2168
      %v2245 = vpop.f32.mrf.mxu0
      %v2246 = vadd.f32 %v2214, %v2245
      %2247 = vmatmul.f32.gmra.mxu0 %v2169
      %v2248 = vpop.f32.mrf.mxu0
      %v2249 = vadd.f32 %v2214, %v2248
      %2250 = vmatmul.f32.gmra.mxu0 %v2170
      %v2251 = vpop.f32.mrf.mxu0
      %v2252 = vadd.f32 %v2214, %v2251
      %2253 = vmatmul.f32.gmra.mxu0 %v2171
      %v2254 = vpop.f32.mrf.mxu0
      %v2255 = vadd.f32 %v2214, %v2254
      %2256 = vmatmul.f32.gmra.mxu0 %v2172
      %v2257 = vpop.f32.mrf.mxu0
      %v2258 = vadd.f32 %v2214, %v2257
      %2259 = vmatmul.f32.gmra.mxu0 %v2173
      %v2260 = vpop.f32.mrf.mxu0
      %v2261 = vadd.f32 %v2214, %v2260
      %2262 = vmatmul.f32.gmra.mxu0 %v2174
      %v2263 = vpop.f32.mrf.mxu0
      %v2264 = vadd.f32 %v2214, %v2263
      %2265 = vmatmul.f32.gmra.mxu0 %v2175
      %v2266 = vpop.f32.mrf.mxu0
      %v2267 = vadd.f32 %v2214, %v2266
      %2268 = vmatmul.f32.gmra.mxu0 %v2176
      %v2269 = vpop.f32.mrf.mxu0
      %v2270 = vadd.f32 %v2214, %v2269
      %2271 = vmatmul.f32.gmra.mxu0 %v2177
      %v2272 = vpop.f32.mrf.mxu0
      %v2273 = vadd.f32 %v2214, %v2272
      %2274 = vmatmul.f32.gmra.mxu0 %v2178
      %v2275 = vpop.f32.mrf.mxu0
      %v2276 = vadd.f32 %v2214, %v2275
      %2277 = vmatmul.f32.gmra.mxu0 %v2179
      %v2278 = vpop.f32.mrf.mxu0
      %v2279 = vadd.f32 %v2214, %v2278
      %2280 = vmatmul.f32.gmra.mxu0 %v2180
      %v2281 = vpop.f32.mrf.mxu0
      %v2282 = vadd.f32 %v2214, %v2281
      %2283 = vmatmul.f32.gmra.mxu0 %v2181
      %v2284 = vpop.f32.mrf.mxu0
      %v2285 = vadd.f32 %v2214, %v2284
      %2286 = vmatmul.f32.gmra.mxu0 %v2182
      %v2287 = vpop.f32.mrf.mxu0
      %v2288 = vadd.f32 %v2214, %v2287
      %2289 = vmatmul.f32.gmra.mxu0 %v2183
      %v2290 = vpop.f32.mrf.mxu0
      %v2291 = vadd.f32 %v2214, %v2290
      %2292 = vmatmul.f32.gmra.mxu0 %v2184
      %v2293 = vpop.f32.mrf.mxu0
      %v2294 = vadd.f32 %v2214, %v2293
      %2295 = vmatmul.f32.gmra.mxu0 %v2185
      %v2296 = vpop.f32.mrf.mxu0
      %v2297 = vadd.f32 %v2214, %v2296
      %2298 = vmatmul.f32.gmra.mxu0 %v2186
      %v2299 = vpop.f32.mrf.mxu0
      %v2300 = vadd.f32 %v2214, %v2299
      %2301 = vmatmul.f32.gmra.mxu0 %v2187
      %v2302 = vpop.f32.mrf.mxu0
      %v2303 = vadd.f32 %v2214, %v2302
      %2304 = vmatmul.f32.gmra.mxu0 %v2188
      %v2305 = vpop.f32.mrf.mxu0
      %v2306 = vadd.f32 %v2214, %v2305
      %2307 = vmatmul.f32.gmra.mxu0 %v2189
      %v2308 = vpop.f32.mrf.mxu0
      %v2309 = vadd.f32 %v2214, %v2308
      %2310 = vmatmul.f32.gmra.mxu0 %v2190
      %v2311 = vpop.f32.mrf.mxu0
      %v2312 = vadd.f32 %v2214, %v2311
      %2313 = vmatmul.f32.gmra.mxu0 %v2191
      %v2314 = vpop.f32.mrf.mxu0
      %v2315 = vadd.f32 %v2214, %v2314
      %2316 = vmatmul.f32.gmra.mxu0 %v2192
      %v2317 = vpop.f32.mrf.mxu0
      %v2318 = vadd.f32 %v2214, %v2317
      %2319 = vmatmul.f32.gmra.mxu0 %v2193
      %v2320 = vpop.f32.mrf.mxu0
      %v2321 = vadd.f32 %v2214, %v2320
      %2322 = vmatmul.f32.gmra.mxu0 %v2194
      %v2323 = vpop.f32.mrf.mxu0
      %v2324 = vadd.f32 %v2214, %v2323
      %2325 = vmatmul.f32.gmra.mxu0 %v2195
      %v2326 = vpop.f32.mrf.mxu0
      %v2327 = vadd.f32 %v2214, %v2326
      %2328 = vdwg.mxu0
      %v2329 = vadd.f32 %v2234, 3.0
      %v2330 = vadd.f32 %v2237, 3.0
      %v2331 = vadd.f32 %v2240, 3.0
      %v2332 = vadd.f32 %v2243, 3.0
      %v2333 = vadd.f32 %v2246, 3.0
      %v2334 = vadd.f32 %v2249, 3.0
      %v2335 = vadd.f32 %v2252, 3.0
      %v2336 = vadd.f32 %v2255, 3.0
      %v2337 = vadd.f32 %v2258, 3.0
      %v2338 = vadd.f32 %v2261, 3.0
      %v2339 = vadd.f32 %v2264, 3.0
      %v2340 = vadd.f32 %v2267, 3.0
      %v2341 = vadd.f32 %v2270, 3.0
      %v2342 = vadd.f32 %v2273, 3.0
      %v2343 = vadd.f32 %v2276, 3.0
      %v2344 = vadd.f32 %v2279, 3.0
      %v2345 = vadd.f32 %v2282, 3.0
      %v2346 = vadd.f32 %v2285, 3.0
      %v2347 = vadd.f32 %v2288, 3.0
      %v2348 = vadd.f32 %v2291, 3.0
      %v2349 = vadd.f32 %v2294, 3.0
      %v2350 = vadd.f32 %v2297, 3.0
      %v2351 = vadd.f32 %v2300, 3.0
      %v2352 = vadd.f32 %v2303, 3.0
      %v2353 = vadd.f32 %v2306, 3.0
      %v2354 = vadd.f32 %v2309, 3.0
      %v2355 = vadd.f32 %v2312, 3.0
      %v2356 = vadd.f32 %v2315, 3.0
      %v2357 = vadd.f32 %v2318, 3.0
      %v2358 = vadd.f32 %v2321, 3.0
      %v2359 = vadd.f32 %v2324, 3.0
      %v2360 = vadd.f32 %v2327, 3.0
      %v2361 = vmax.f32 %v2329, 0.0
      %v2362 = vmax.f32 %v2330, 0.0
      %v2363 = vmax.f32 %v2331, 0.0
      %v2364 = vmax.f32 %v2332, 0.0
      %v2365 = vmax.f32 %v2333, 0.0
      %v2366 = vmax.f32 %v2334, 0.0
      %v2367 = vmax.f32 %v2335, 0.0
      %v2368 = vmax.f32 %v2336, 0.0
      %v2369 = vmax.f32 %v2337, 0.0
      %v2370 = vmax.f32 %v2338, 0.0
      %v2371 = vmax.f32 %v2339, 0.0
      %v2372 = vmax.f32 %v2340, 0.0
      %v2373 = vmax.f32 %v2341, 0.0
      %v2374 = vmax.f32 %v2342, 0.0
      %v2375 = vmax.f32 %v2343, 0.0
      %v2376 = vmax.f32 %v2344, 0.0
      %v2377 = vmax.f32 %v2345, 0.0
      %v2378 = vmax.f32 %v2346, 0.0
      %v2379 = vmax.f32 %v2347, 0.0
      %v2380 = vmax.f32 %v2348, 0.0
      %v2381 = vmax.f32 %v2349, 0.0
      %v2382 = vmax.f32 %v2350, 0.0
      %v2383 = vmax.f32 %v2351, 0.0
      %v2384 = vmax.f32 %v2352, 0.0
      %v2385 = vmax.f32 %v2353, 0.0
      %v2386 = vmax.f32 %v2354, 0.0
      %v2387 = vmax.f32 %v2355, 0.0
      %v2388 = vmax.f32 %v2356, 0.0
      %v2389 = vmax.f32 %v2357, 0.0
      %v2390 = vmax.f32 %v2358, 0.0
      %v2391 = vmax.f32 %v2359, 0.0
      %v2392 = vmax.f32 %v2360, 0.0
      %v2393 = vmin.f32 %v2361, 6.0
      %v2394 = vmin.f32 %v2362, 6.0
      %v2395 = vmin.f32 %v2363, 6.0
      %v2396 = vmin.f32 %v2364, 6.0
      %v2397 = vmin.f32 %v2365, 6.0
      %v2398 = vmin.f32 %v2366, 6.0
      %v2399 = vmin.f32 %v2367, 6.0
      %v2400 = vmin.f32 %v2368, 6.0
      %v2401 = vmin.f32 %v2369, 6.0
      %v2402 = vmin.f32 %v2370, 6.0
      %v2403 = vmin.f32 %v2371, 6.0
      %v2404 = vmin.f32 %v2372, 6.0
      %v2405 = vmin.f32 %v2373, 6.0
      %v2406 = vmin.f32 %v2374, 6.0
      %v2407 = vmin.f32 %v2375, 6.0
      %v2408 = vmin.f32 %v2376, 6.0
      %v2409 = vmin.f32 %v2377, 6.0
      %v2410 = vmin.f32 %v2378, 6.0
      %v2411 = vmin.f32 %v2379, 6.0
      %v2412 = vmin.f32 %v2380, 6.0
      %v2413 = vmin.f32 %v2381, 6.0
      %v2414 = vmin.f32 %v2382, 6.0
      %v2415 = vmin.f32 %v2383, 6.0
      %v2416 = vmin.f32 %v2384, 6.0
      %v2417 = vmin.f32 %v2385, 6.0
      %v2418 = vmin.f32 %v2386, 6.0
      %v2419 = vmin.f32 %v2387, 6.0
      %v2420 = vmin.f32 %v2388, 6.0
      %v2421 = vmin.f32 %v2389, 6.0
      %v2422 = vmin.f32 %v2390, 6.0
      %v2423 = vmin.f32 %v2391, 6.0
      %v2424 = vmin.f32 %v2392, 6.0
      %v2425 = vmul.f32 %v2234, %v2393
      %v2426 = vmul.f32 %v2237, %v2394
      %v2427 = vmul.f32 %v2240, %v2395
      %v2428 = vmul.f32 %v2243, %v2396
      %v2429 = vmul.f32 %v2246, %v2397
      %v2430 = vmul.f32 %v2249, %v2398
      %v2431 = vmul.f32 %v2252, %v2399
      %v2432 = vmul.f32 %v2255, %v2400
      %v2433 = vmul.f32 %v2258, %v2401
      %v2434 = vmul.f32 %v2261, %v2402
      %v2435 = vmul.f32 %v2264, %v2403
      %v2436 = vmul.f32 %v2267, %v2404
      %v2437 = vmul.f32 %v2270, %v2405
      %v2438 = vmul.f32 %v2273, %v2406
      %v2439 = vmul.f32 %v2276, %v2407
      %v2440 = vmul.f32 %v2279, %v2408
      %v2441 = vmul.f32 %v2282, %v2409
      %v2442 = vmul.f32 %v2285, %v2410
      %v2443 = vmul.f32 %v2288, %v2411
      %v2444 = vmul.f32 %v2291, %v2412
      %v2445 = vmul.f32 %v2294, %v2413
      %v2446 = vmul.f32 %v2297, %v2414
      %v2447 = vmul.f32 %v2300, %v2415
      %v2448 = vmul.f32 %v2303, %v2416
      %v2449 = vmul.f32 %v2306, %v2417
      %v2450 = vmul.f32 %v2309, %v2418
      %v2451 = vmul.f32 %v2312, %v2419
      %v2452 = vmul.f32 %v2315, %v2420
      %v2453 = vmul.f32 %v2318, %v2421
      %v2454 = vmul.f32 %v2321, %v2422
      %v2455 = vmul.f32 %v2324, %v2423
      %v2456 = vmul.f32 %v2327, %v2424
      %v2457 = vmul.f32 %v2425, 0.16666667
      %v2458 = vmul.f32 %v2426, 0.16666667
      %v2459 = vmul.f32 %v2427, 0.16666667
      %v2460 = vmul.f32 %v2428, 0.16666667
      %v2461 = vmul.f32 %v2429, 0.16666667
      %v2462 = vmul.f32 %v2430, 0.16666667
      %v2463 = vmul.f32 %v2431, 0.16666667
      %v2464 = vmul.f32 %v2432, 0.16666667
      %v2465 = vmul.f32 %v2433, 0.16666667
      %v2466 = vmul.f32 %v2434, 0.16666667
      %v2467 = vmul.f32 %v2435, 0.16666667
      %v2468 = vmul.f32 %v2436, 0.16666667
      %v2469 = vmul.f32 %v2437, 0.16666667
      %v2470 = vmul.f32 %v2438, 0.16666667
      %v2471 = vmul.f32 %v2439, 0.16666667
      %v2472 = vmul.f32 %v2440, 0.16666667
      %v2473 = vmul.f32 %v2441, 0.16666667
      %v2474 = vmul.f32 %v2442, 0.16666667
      %v2475 = vmul.f32 %v2443, 0.16666667
      %v2476 = vmul.f32 %v2444, 0.16666667
      %v2477 = vmul.f32 %v2445, 0.16666667
      %v2478 = vmul.f32 %v2446, 0.16666667
      %v2479 = vmul.f32 %v2447, 0.16666667
      %v2480 = vmul.f32 %v2448, 0.16666667
      %v2481 = vmul.f32 %v2449, 0.16666667
      %v2482 = vmul.f32 %v2450, 0.16666667
      %v2483 = vmul.f32 %v2451, 0.16666667
      %v2484 = vmul.f32 %v2452, 0.16666667
      %v2485 = vmul.f32 %v2453, 0.16666667
      %v2486 = vmul.f32 %v2454, 0.16666667
      %v2487 = vmul.f32 %v2455, 0.16666667
      %v2488 = vmul.f32 %v2456, 0.16666667
      %2489 = vst [vmem:[%s262] sm:$0xff] %v2457
      %2490 = vst [vmem:[%s262 + $0x8] sm:$0xff] %v2458
      %2491 = vst [vmem:[%s262 + $0x10] sm:$0xff] %v2459
      %2492 = vst [vmem:[%s262 + $0x18] sm:$0xff] %v2460
      %2493 = vst [vmem:[%s262 + $0x20] sm:$0xff] %v2461
      %2494 = vst [vmem:[%s262 + $0x28] sm:$0xff] %v2462
      %2495 = vst [vmem:[%s262 + $0x30] sm:$0xff] %v2463
      %2496 = vst [vmem:[%s262 + $0x38] sm:$0xff] %v2464
      %2497 = vst [vmem:[%s262 + $0x40] sm:$0xff] %v2465
      %2498 = vst [vmem:[%s262 + $0x48] sm:$0xff] %v2466
      %2499 = vst [vmem:[%s262 + $0x50] sm:$0xff] %v2467
      %2500 = vst [vmem:[%s262 + $0x58] sm:$0xff] %v2468
      %2501 = vst [vmem:[%s262 + $0x60] sm:$0xff] %v2469
      %2502 = vst [vmem:[%s262 + $0x68] sm:$0xff] %v2470
      %2503 = vst [vmem:[%s262 + $0x70] sm:$0xff] %v2471
      %2504 = vst [vmem:[%s262 + $0x78] sm:$0xff] %v2472
      %2505 = vst [vmem:[%s262 + $0x80] sm:$0xff] %v2473
      %2506 = vst [vmem:[%s262 + $0x88] sm:$0xff] %v2474
      %2507 = vst [vmem:[%s262 + $0x90] sm:$0xff] %v2475
      %2508 = vst [vmem:[%s262 + $0x98] sm:$0xff] %v2476
      %2509 = vst [vmem:[%s262 + $0xa0] sm:$0xff] %v2477
      %2510 = vst [vmem:[%s262 + $0xa8] sm:$0xff] %v2478
      %2511 = vst [vmem:[%s262 + $0xb0] sm:$0xff] %v2479
      %2512 = vst [vmem:[%s262 + $0xb8] sm:$0xff] %v2480
      %2513 = vst [vmem:[%s262 + $0xc0] sm:$0xff] %v2481
      %2514 = vst [vmem:[%s262 + $0xc8] sm:$0xff] %v2482
      %2515 = vst [vmem:[%s262 + $0xd0] sm:$0xff] %v2483
      %2516 = vst [vmem:[%s262 + $0xd8] sm:$0xff] %v2484
      %2517 = vst [vmem:[%s262 + $0xe0] sm:$0xff] %v2485
      %2518 = vst [vmem:[%s262 + $0xe8] sm:$0xff] %v2486
      %2519 = vst [vmem:[%s262 + $0xf0] sm:$0xff] %v2487
      %2520 = vst [vmem:[%s262 + $0xf8] sm:$0xff] %v2488
      %s2521 = smul.u32 16, %s21
      %p2522 = scmp.lt.s32.totalorder %s20, 1
      %s2523 = scalar_select %p2522, %s20, 1
      %p2524 = scmp.lt.s32.totalorder %s2521, 15
      %s2525 = scalar_select %p2524, %s2521, 15
      %s2526 = smul.addr %s2525, 2
      %s2527 = smul.addr %s2523, 32
      %s2528 = sadd.s32 %s2526, %s2527
      %s2529 = smul.addr %s2528, 8
      %s2530 = scalar_lea.vmem %s5, %s2529
      // Predicated region
      $region41: #{depthwise_separable_forward.1} parent=39 // pred_check
        %p2531 = pneg %p160
      $region42: #{depthwise_separable_forward.1} parent=39 // pred_check_branch
        %2533 = sbr.rel (%p2531) target = $region44
      $region43: #{depthwise_separable_forward.1} parent=39 // pred_region
        %s2534 = smul.u32 16, %s21
      $region44: #{depthwise_separable_forward.1} parent=39 // pred_fallthru
        _
    $region40: #{depthwise_separable_forward.1} parent=5 // pred_fallthru
      _
    %p2535 = scmp.le.s32.totalorder 2, %s11
    // Predicated region
    $region45: #{depthwise_separable_forward.1} parent=5 // pred_check
      %p2536 = pneg %p2535
    $region46: #{depthwise_separable_forward.1} parent=5 // pred_check_branch
      %2538 = sbr.rel (%p2536) target = $region48
    $region47: #{depthwise_separable_forward.1} parent=5 // pred_region
      %s2539 = ssub.s32 %s11, 2
      // Predicated region
      $region49: #{depthwise_separable_forward.1} parent=47 // pred_check
        %p2540 = pneg %p166
      $region50: #{depthwise_separable_forward.1} parent=47 // pred_check_branch
        %2542 = sbr.rel (%p2540) target = $region52
      $region51: #{depthwise_separable_forward.1} parent=47 // pred_region
        %s2543 = smul.u32 16, %s23
        %p2544 = scmp.lt.s32.totalorder %s22, 1
        %s2545 = scalar_select %p2544, %s22, 1
        %p2546 = scmp.lt.s32.totalorder %s2543, 15
        %s2547 = scalar_select %p2546, %s2543, 15
        %s2548 = smul.addr %s2547, 2
        %s2549 = smul.addr %s2545, 32
        %s2550 = sadd.s32 %s2548, %s2549
        %s2551 = smul.addr %s2550, 8
        %s2552 = scalar_lea.vmem %s5, %s2551
      $region52: #{depthwise_separable_forward.1} parent=47 // pred_fallthru
        _
    $region48: #{depthwise_separable_forward.1} parent=5 // pred_fallthru
      _
  $region6: #{depthwise_separable_forward.1} parent=0 // loop_footer
    %s15 = sadd.s32 1, %s11
  $region7: #{depthwise_separable_forward.1} parent=0 // loop_footer_branch
    %10 = sbr.rel target = $region3
  $region8: #{depthwise_separable_forward.1} parent=0 // loop_exit
    _

</llo_original>
